<compile_context>
chip_gen: v7x
topology: tpu7x:2x2x1
jax: 0.10.0
libtpu: 0.0.40
codegen_flags: <defaults>
</compile_context>

<pallas_src>
import functools

import jax
import jax.numpy as jnp
from jax import lax
from jax.experimental import pallas as pl
from jax.experimental.pallas import tpu as pltpu


# -----------------------------------------------------------------------------
# Fused encoder kernel: bidirectional LSTM + attention pooling, single call
# -----------------------------------------------------------------------------
def _encoder_kernel(x_ref, wih_ref, b_ref, whh_ref, w1_ref, b1_ref, w2_ref,
                    b2_ref, out_ref, fwd_scr, bwd_scr):
    # x_ref: (T*Bp, E), time-major flattened (row block t = batch at step t)
    # wih_ref: (E, 8H)  combined input weights  [fwd gates | bwd gates]
    # b_ref:   (1, 8H)  combined biases (b_ih + b_hh per direction)
    # whh_ref: (2H, 8H) block-diagonal recurrent weights
    # w1_ref:(2H,D) b1:(1,D) w2:(D,D) b2:(1,D)  attention fc1/fc2
    # out_ref: (Bp, 2H) pooled sentence embeddings
    TB = x_ref.shape[0]
    Bp = out_ref.shape[0]
    T = TB // Bp
    H2 = whh_ref.shape[0]          # 2H
    H = H2 // 2
    G4 = 4 * H                     # gates per direction

    # ---- hoisted input projection: all time steps x both directions ---------
    xproj = (jnp.dot(x_ref[...], wih_ref[...],
                     preferred_element_type=jnp.float32)
             + b_ref[...])                                   # (T*Bp, 8H)

    whh = whh_ref[...]

    def lstm_cell(gates, c_prev):
        # PyTorch gate order: i, f, g, o
        i = jax.nn.sigmoid(gates[:, 0 * H:1 * H])
        f = jax.nn.sigmoid(gates[:, 1 * H:2 * H])
        g = jnp.tanh(gates[:, 2 * H:3 * H])
        o = jax.nn.sigmoid(gates[:, 3 * H:4 * H])
        c_new = f * c_prev + i * g
        h_new = o * jnp.tanh(c_new)
        return h_new, c_new

    h = jnp.zeros((Bp, H2), jnp.float32)        # [h_fwd || h_bwd]
    c_f = jnp.zeros((Bp, H), jnp.float32)
    c_b = jnp.zeros((Bp, H), jnp.float32)

    # ---- unrolled recurrence, fwd & bwd fused (bwd reads time T-1-t) --------
    for t in range(T):
        r = t * Bp
        rr = (T - 1 - t) * Bp
        rec = jnp.dot(h, whh, preferred_element_type=jnp.float32)   # (Bp, 8H)
        g_f = rec[:, :G4] + xproj[r:r + Bp, :G4]
        g_b = rec[:, G4:] + xproj[rr:rr + Bp, G4:]
        h_f, c_f = lstm_cell(g_f, c_f)
        h_b, c_b = lstm_cell(g_b, c_b)
        h = jnp.concatenate([h_f, h_b], axis=-1)
        fwd_scr[r:r + Bp, :] = h_f              # original time order
        bwd_scr[rr:rr + Bp, :] = h_b            # stored back in time order

    # ---- attention pooling (flat 2D matmuls) --------------------------------
    outs = jnp.concatenate([fwd_scr[...], bwd_scr[...]], axis=-1)   # (T*Bp, 2H)
    h1 = jnp.tanh(jnp.dot(outs, w1_ref[...],
                          preferred_element_type=jnp.float32) + b1_ref[...])
    s = (jnp.dot(h1, w2_ref[...],
                 preferred_element_type=jnp.float32) + b2_ref[...])  # (T*Bp, D)

    # softmax over time for each (batch, d); rows are grouped per time step.
    m = s[0:Bp, :]
    for t in range(1, T):
        m = jnp.maximum(m, s[t * Bp:(t + 1) * Bp, :])
    es = []
    denom = jnp.zeros_like(m)
    for t in range(T):
        e = jnp.exp(s[t * Bp:(t + 1) * Bp, :] - m)
        es.append(e)
        denom = denom + e
    inv = 1.0 / denom                                                # (Bp, D)

    # mean_d(sum_t w[b,d,t] x[b,t,k]) == sum_t (mean_d w[b,d,t]) x[b,t,k]
    acc = jnp.zeros((Bp, H2), jnp.float32)
    for t in range(T):
        wbar = jnp.mean(es[t] * inv, axis=-1, keepdims=True)         # (Bp, 1)
        acc = acc + wbar * outs[t * Bp:(t + 1) * Bp, :]
    out_ref[...] = acc


# -----------------------------------------------------------------------------
# Encoder forward (thin glue + single fused kernel call)
# -----------------------------------------------------------------------------
def encoder_forward(tokens, params, num_support):
    B, S = tokens.shape
    H = params["w_hh_comb"].shape[0] // 2
    E = params["embedding"].shape[1]
    Bp = ((B + 7) // 8) * 8                     # pad batch to sublane multiple

    # TODO(synk): embedding gather stays in XLA (no rectangular BlockSpec for a
    # per-token gather); everything downstream is one fused Pallas kernel.
    tok_p = jnp.pad(tokens, ((0, Bp - B), (0, 0)))
    x_seq = jnp.take(params["embedding"], tok_p.T, axis=0)   # (S, Bp, E)
    x_flat = x_seq.reshape(S * Bp, E)                        # time-major flat

    sent = pl.pallas_call(
        _encoder_kernel,
        out_shape=jax.ShapeDtypeStruct((Bp, 2 * H), jnp.float32),
        scratch_shapes=[
            pltpu.VMEM((S * Bp, H), jnp.float32),   # fwd hidden states
            pltpu.VMEM((S * Bp, H), jnp.float32),   # bwd hidden states
        ],
    )(x_flat,
      params["w_ih_comb"], params["b_comb"], params["w_hh_comb"],
      params["fc1_w_t"], params["fc1_b"], params["fc2_w_t"], params["fc2_b"])

    sent = sent[:B]
    support = sent[:num_support]
    query = sent[num_support:]
    return support, query


# -----------------------------------------------------------------------------
# Pure-JAX reference (lax.scan) used only for a numerical sanity check
# -----------------------------------------------------------------------------
def _lstm_ref(x_seq, wih_t, whh_t, b):
    T, B, _ = x_seq.shape
    H = whh_t.shape[0]

    def step(carry, x_t):
        h, c = carry
        g = x_t @ wih_t + h @ whh_t + b
        i = jax.nn.sigmoid(g[:, :H])
        f = jax.nn.sigmoid(g[:, H:2 * H])
        gg = jnp.tanh(g[:, 2 * H:3 * H])
        o = jax.nn.sigmoid(g[:, 3 * H:])
        c = f * c + i * gg
        h = o * jnp.tanh(c)
        return (h, c), h

    init = (jnp.zeros((B, H), jnp.float32), jnp.zeros((B, H), jnp.float32))
    _, ys = lax.scan(step, init, x_seq)
    return ys


def _ref_forward(tokens, params, num_support):
    emb = jnp.take(params["embedding"], tokens, axis=0)
    x_seq = jnp.transpose(emb, (1, 0, 2))
    fwd = _lstm_ref(x_seq, params["w_ih_f_t"], params["w_hh_f_t"], params["b_f"])
    bwd = _lstm_ref(x_seq[::-1], params["w_ih_r_t"], params["w_hh_r_t"],
                    params["b_r"])[::-1]
    outputs = jnp.transpose(jnp.concatenate([fwd, bwd], -1), (1, 0, 2))
    h1 = jnp.tanh(outputs @ params["fc1_w_t"] + params["fc1_b"])
    w = h1 @ params["fc2_w_t"] + params["fc2_b"]
    w = jnp.transpose(w, (0, 2, 1))
    w = jax.nn.softmax(w, axis=-1)
    emb2 = jnp.einsum("bdt,btk->bdk", w, outputs)
    sent = jnp.mean(emb2, axis=1)
    return sent[:num_support], sent[num_support:]


# -----------------------------------------------------------------------------
# Deterministic parameter construction (PyTorch-layout + kernel-layout)
# -----------------------------------------------------------------------------
def make_params(key, vocab_size, embed_size, hidden_size, output_dim):
    ks = jax.random.split(key, 12)
    H, E, D = hidden_size, embed_size, output_dim
    scale = 1.0 / jnp.sqrt(H)

    def nrm(k, shape, s):
        return (s * jax.random.normal(k, shape)).astype(jnp.float32)

    # PyTorch LSTM weights: W_ih (4H,E), W_hh (4H,H), biases (4H,) per direction.
    w_ih_f = nrm(ks[0], (4 * H, E), scale)
    w_hh_f = nrm(ks[1], (4 * H, H), scale)
    b_ih_f = nrm(ks[2], (4 * H,), scale)
    b_hh_f = nrm(ks[3], (4 * H,), scale)
    w_ih_r = nrm(ks[4], (4 * H, E), scale)
    w_hh_r = nrm(ks[5], (4 * H, H), scale)
    b_ih_r = nrm(ks[6], (4 * H,), scale)
    b_hh_r = nrm(ks[7], (4 * H,), scale)

    # fc1: (D, 2H) xavier_normal; fc2: (D, D) xavier_normal.
    fc1_w = nrm(ks[8], (D, 2 * H), jnp.sqrt(2.0 / (2 * H + D)))
    fc2_w = nrm(ks[9], (D, D), jnp.sqrt(2.0 / (D + D)))
    fc1_b = nrm(ks[10], (D,), 0.1)
    fc2_b = nrm(ks[11], (D,), 0.1)

    embedding = nrm(jax.random.fold_in(key, 99), (vocab_size, E), 1.0)

    # Kernel layout: fused direction weights.
    #   w_ih_comb (E, 8H): cols [:4H] = fwd gates, cols [4H:] = bwd gates
    #   w_hh_comb (2H, 8H): block-diagonal, [h_f || h_b] -> [fwd | bwd] gates
    w_ih_comb = jnp.concatenate([w_ih_f.T, w_ih_r.T], axis=1)
    w_hh_comb = jnp.zeros((2 * H, 8 * H), jnp.float32)
    w_hh_comb = w_hh_comb.at[:H, :4 * H].set(w_hh_f.T)
    w_hh_comb = w_hh_comb.at[H:, 4 * H:].set(w_hh_r.T)
    b_comb = jnp.concatenate([b_ih_f + b_hh_f, b_ih_r + b_hh_r])[None, :]

    return {
        "embedding": embedding,
        # reference layout
        "w_ih_f_t": w_ih_f.T, "w_hh_f_t": w_hh_f.T, "b_f": (b_ih_f + b_hh_f)[None, :],
        "w_ih_r_t": w_ih_r.T, "w_hh_r_t": w_hh_r.T, "b_r": (b_ih_r + b_hh_r)[None, :],
        # kernel layout
        "w_ih_comb": w_ih_comb, "w_hh_comb": w_hh_comb, "b_comb": b_comb,
        "fc1_w_t": fc1_w.T, "fc1_b": fc1_b[None, :],
        "fc2_w_t": fc2_w.T, "fc2_b": fc2_b[None, :],
    }


if __name__ == "__main__":
    # Small shapes consistent with the module.
    num_classes = 2
    num_support_per_class = 2
    num_support = num_classes * num_support_per_class   # 4
    num_query = 2
    batch = num_support + num_query                     # 6
    seq_len = 8
    vocab_size = 50
    embed_size = 32
    hidden_size = 32
    output_dim = 32

    key = jax.random.PRNGKey(0)
    pkey, tkey = jax.random.split(key)
    params = make_params(pkey, vocab_size, embed_size, hidden_size, output_dim)
    tokens = jax.random.randint(tkey, (batch, seq_len), 0, vocab_size,
                                dtype=jnp.int32)

    fwd = jax.jit(functools.partial(encoder_forward, num_support=num_support))
    support, query = fwd(tokens, params)
    jax.block_until_ready((support, query))

    assert support.shape == (num_support, 2 * hidden_size)
    assert query.shape == (num_query, 2 * hidden_size)

    # Numerical sanity check against a pure-JAX reference.
    ref_s, ref_q = _ref_forward(tokens, params, num_support)
    assert jnp.allclose(support, ref_s, atol=1e-2, rtol=1e-2)
    assert jnp.allclose(query, ref_q, atol=1e-2, rtol=1e-2)

    print("KERNEL_OK")
</pallas_src>

<mosaic_0001>
module attributes {stable_mosaic.version = 11 : i64} {
  func.func @_encoder_kernel(%arg0: memref<64x32xf32, #tpu.memory_space<vmem>>, %arg1: memref<32x256xf32, #tpu.memory_space<vmem>>, %arg2: memref<1x256xf32, #tpu.memory_space<vmem>>, %arg3: memref<64x256xf32, #tpu.memory_space<vmem>>, %arg4: memref<64x32xf32, #tpu.memory_space<vmem>>, %arg5: memref<1x32xf32, #tpu.memory_space<vmem>>, %arg6: memref<32x32xf32, #tpu.memory_space<vmem>>, %arg7: memref<1x32xf32, #tpu.memory_space<vmem>>, %arg8: memref<8x64xf32, #tpu.memory_space<vmem>>, %arg9: memref<64x32xf32, #tpu.memory_space<vmem>>, %arg10: memref<64x32xf32, #tpu.memory_space<vmem>>) attributes {dimension_semantics = [], scalar_prefetch = 0 : i64, scratch_operands = 2 : i64, tpu.core_type = #tpu.core_type<tc>} {
    %c0 = arith.constant 0 : index
    %c0_0 = arith.constant 0 : index
    %0 = vector.load %arg0[%c0, %c0_0] : memref<64x32xf32, #tpu.memory_space<vmem>>, vector<64x32xf32>
    %c0_1 = arith.constant 0 : index
    %c0_2 = arith.constant 0 : index
    %1 = vector.load %arg1[%c0_1, %c0_2] : memref<32x256xf32, #tpu.memory_space<vmem>>, vector<32x256xf32>
    %cst = arith.constant dense<0.000000e+00> : vector<64x256xf32>
    %2 = tpu.matmul %0, %1, %cst {dimension_numbers = #tpu.dot_dimension_numbers<[1], [0], [0], [1], [0, 0, 1, 1], [], []>} : vector<64x32xf32>, vector<32x256xf32>, vector<64x256xf32> -> vector<64x256xf32>
    %c0_3 = arith.constant 0 : index
    %c0_4 = arith.constant 0 : index
    %3 = vector.load %arg2[%c0_3, %c0_4] : memref<1x256xf32, #tpu.memory_space<vmem>>, vector<1x256xf32>
    %4 = vector.broadcast %3 : vector<1x256xf32> to vector<64x256xf32>
    %5 = arith.addf %2, %4 : vector<64x256xf32>
    %c0_5 = arith.constant 0 : index
    %c0_6 = arith.constant 0 : index
    %6 = vector.load %arg3[%c0_5, %c0_6] : memref<64x256xf32, #tpu.memory_space<vmem>>, vector<64x256xf32>
    %cst_7 = arith.constant 0.000000e+00 : f32
    %7 = vector.broadcast %cst_7 : f32 to vector<8x64xf32>
    %cst_8 = arith.constant 0.000000e+00 : f32
    %8 = vector.broadcast %cst_8 : f32 to vector<8x32xf32>
    %cst_9 = arith.constant 0.000000e+00 : f32
    %9 = vector.broadcast %cst_9 : f32 to vector<8x32xf32>
    %cst_10 = arith.constant dense<0.000000e+00> : vector<8x256xf32>
    %10 = tpu.matmul %7, %6, %cst_10 {dimension_numbers = #tpu.dot_dimension_numbers<[1], [0], [0], [1], [0, 0, 1, 1], [], []>} : vector<8x64xf32>, vector<64x256xf32>, vector<8x256xf32> -> vector<8x256xf32>
    %11 = vector.extract_strided_slice %10 {offsets = [0, 0], sizes = [8, 128], strides = [1, 1]} : vector<8x256xf32> to vector<8x128xf32>
    %12 = vector.extract_strided_slice %5 {offsets = [0, 0], sizes = [8, 128], strides = [1, 1]} : vector<64x256xf32> to vector<8x128xf32>
    %13 = arith.addf %11, %12 : vector<8x128xf32>
    %14 = vector.extract_strided_slice %10 {offsets = [0, 128], sizes = [8, 128], strides = [1, 1]} : vector<8x256xf32> to vector<8x128xf32>
    %15 = vector.extract_strided_slice %5 {offsets = [56, 128], sizes = [8, 128], strides = [1, 1]} : vector<64x256xf32> to vector<8x128xf32>
    %16 = arith.addf %14, %15 : vector<8x128xf32>
    %17 = vector.extract_strided_slice %13 {offsets = [0, 0], sizes = [8, 32], strides = [1, 1]} : vector<8x128xf32> to vector<8x32xf32>
    %18 = arith.negf %17 : vector<8x32xf32>
    %19 = math.exp %18 : vector<8x32xf32>
    %cst_11 = arith.constant 1.000000e+00 : f32
    %20 = vector.broadcast %cst_11 : f32 to vector<8x32xf32>
    %21 = arith.addf %20, %19 : vector<8x32xf32>
    %22 = arith.divf %20, %21 : vector<8x32xf32>
    %23 = vector.extract_strided_slice %13 {offsets = [0, 32], sizes = [8, 32], strides = [1, 1]} : vector<8x128xf32> to vector<8x32xf32>
    %24 = arith.negf %23 : vector<8x32xf32>
    %25 = math.exp %24 : vector<8x32xf32>
    %cst_12 = arith.constant 1.000000e+00 : f32
    %26 = vector.broadcast %cst_12 : f32 to vector<8x32xf32>
    %27 = arith.addf %26, %25 : vector<8x32xf32>
    %28 = arith.divf %26, %27 : vector<8x32xf32>
    %29 = vector.extract_strided_slice %13 {offsets = [0, 64], sizes = [8, 32], strides = [1, 1]} : vector<8x128xf32> to vector<8x32xf32>
    %30 = math.tanh %29 : vector<8x32xf32>
    %31 = vector.extract_strided_slice %13 {offsets = [0, 96], sizes = [8, 32], strides = [1, 1]} : vector<8x128xf32> to vector<8x32xf32>
    %32 = arith.negf %31 : vector<8x32xf32>
    %33 = math.exp %32 : vector<8x32xf32>
    %cst_13 = arith.constant 1.000000e+00 : f32
    %34 = vector.broadcast %cst_13 : f32 to vector<8x32xf32>
    %35 = arith.addf %34, %33 : vector<8x32xf32>
    %36 = arith.divf %34, %35 : vector<8x32xf32>
    %37 = arith.mulf %28, %8 : vector<8x32xf32>
    %38 = arith.mulf %22, %30 : vector<8x32xf32>
    %39 = arith.addf %37, %38 : vector<8x32xf32>
    %40 = math.tanh %39 : vector<8x32xf32>
    %41 = arith.mulf %36, %40 : vector<8x32xf32>
    %42 = vector.extract_strided_slice %16 {offsets = [0, 0], sizes = [8, 32], strides = [1, 1]} : vector<8x128xf32> to vector<8x32xf32>
    %43 = arith.negf %42 : vector<8x32xf32>
    %44 = math.exp %43 : vector<8x32xf32>
    %cst_14 = arith.constant 1.000000e+00 : f32
    %45 = vector.broadcast %cst_14 : f32 to vector<8x32xf32>
    %46 = arith.addf %45, %44 : vector<8x32xf32>
    %47 = arith.divf %45, %46 : vector<8x32xf32>
    %48 = vector.extract_strided_slice %16 {offsets = [0, 32], sizes = [8, 32], strides = [1, 1]} : vector<8x128xf32> to vector<8x32xf32>
    %49 = arith.negf %48 : vector<8x32xf32>
    %50 = math.exp %49 : vector<8x32xf32>
    %cst_15 = arith.constant 1.000000e+00 : f32
    %51 = vector.broadcast %cst_15 : f32 to vector<8x32xf32>
    %52 = arith.addf %51, %50 : vector<8x32xf32>
    %53 = arith.divf %51, %52 : vector<8x32xf32>
    %54 = vector.extract_strided_slice %16 {offsets = [0, 64], sizes = [8, 32], strides = [1, 1]} : vector<8x128xf32> to vector<8x32xf32>
    %55 = math.tanh %54 : vector<8x32xf32>
    %56 = vector.extract_strided_slice %16 {offsets = [0, 96], sizes = [8, 32], strides = [1, 1]} : vector<8x128xf32> to vector<8x32xf32>
    %57 = arith.negf %56 : vector<8x32xf32>
    %58 = math.exp %57 : vector<8x32xf32>
    %cst_16 = arith.constant 1.000000e+00 : f32
    %59 = vector.broadcast %cst_16 : f32 to vector<8x32xf32>
    %60 = arith.addf %59, %58 : vector<8x32xf32>
    %61 = arith.divf %59, %60 : vector<8x32xf32>
    %62 = arith.mulf %53, %9 : vector<8x32xf32>
    %63 = arith.mulf %47, %55 : vector<8x32xf32>
    %64 = arith.addf %62, %63 : vector<8x32xf32>
    %65 = math.tanh %64 : vector<8x32xf32>
    %66 = arith.mulf %61, %65 : vector<8x32xf32>
    %67 = tpu.concatenate %41, %66 in 1 : vector<8x32xf32>, vector<8x32xf32> -> vector<8x64xf32>
    %c0_17 = arith.constant 0 : index
    %c0_18 = arith.constant 0 : index
    %68 = vector.load %arg9[%c0_17, %c0_18] : memref<64x32xf32, #tpu.memory_space<vmem>>, vector<8x32xf32>
    tpu.vector_store %arg9[%c0_17, %c0_18], %41 {strides = array<i32>} : memref<64x32xf32, #tpu.memory_space<vmem>>, vector<8x32xf32>,
    %c56 = arith.constant 56 : index
    %c0_19 = arith.constant 0 : index
    %69 = vector.load %arg10[%c56, %c0_19] : memref<64x32xf32, #tpu.memory_space<vmem>>, vector<8x32xf32>
    tpu.vector_store %arg10[%c56, %c0_19], %66 {strides = array<i32>} : memref<64x32xf32, #tpu.memory_space<vmem>>, vector<8x32xf32>,
    %cst_20 = arith.constant dense<0.000000e+00> : vector<8x256xf32>
    %70 = tpu.matmul %67, %6, %cst_20 {dimension_numbers = #tpu.dot_dimension_numbers<[1], [0], [0], [1], [0, 0, 1, 1], [], []>} : vector<8x64xf32>, vector<64x256xf32>, vector<8x256xf32> -> vector<8x256xf32>
    %71 = vector.extract_strided_slice %70 {offsets = [0, 0], sizes = [8, 128], strides = [1, 1]} : vector<8x256xf32> to vector<8x128xf32>
    %72 = vector.extract_strided_slice %5 {offsets = [8, 0], sizes = [8, 128], strides = [1, 1]} : vector<64x256xf32> to vector<8x128xf32>
    %73 = arith.addf %71, %72 : vector<8x128xf32>
    %74 = vector.extract_strided_slice %70 {offsets = [0, 128], sizes = [8, 128], strides = [1, 1]} : vector<8x256xf32> to vector<8x128xf32>
    %75 = vector.extract_strided_slice %5 {offsets = [48, 128], sizes = [8, 128], strides = [1, 1]} : vector<64x256xf32> to vector<8x128xf32>
    %76 = arith.addf %74, %75 : vector<8x128xf32>
    %77 = vector.extract_strided_slice %73 {offsets = [0, 0], sizes = [8, 32], strides = [1, 1]} : vector<8x128xf32> to vector<8x32xf32>
    %78 = arith.negf %77 : vector<8x32xf32>
    %79 = math.exp %78 : vector<8x32xf32>
    %cst_21 = arith.constant 1.000000e+00 : f32
    %80 = vector.broadcast %cst_21 : f32 to vector<8x32xf32>
    %81 = arith.addf %80, %79 : vector<8x32xf32>
    %82 = arith.divf %80, %81 : vector<8x32xf32>
    %83 = vector.extract_strided_slice %73 {offsets = [0, 32], sizes = [8, 32], strides = [1, 1]} : vector<8x128xf32> to vector<8x32xf32>
    %84 = arith.negf %83 : vector<8x32xf32>
    %85 = math.exp %84 : vector<8x32xf32>
    %cst_22 = arith.constant 1.000000e+00 : f32
    %86 = vector.broadcast %cst_22 : f32 to vector<8x32xf32>
    %87 = arith.addf %86, %85 : vector<8x32xf32>
    %88 = arith.divf %86, %87 : vector<8x32xf32>
    %89 = vector.extract_strided_slice %73 {offsets = [0, 64], sizes = [8, 32], strides = [1, 1]} : vector<8x128xf32> to vector<8x32xf32>
    %90 = math.tanh %89 : vector<8x32xf32>
    %91 = vector.extract_strided_slice %73 {offsets = [0, 96], sizes = [8, 32], strides = [1, 1]} : vector<8x128xf32> to vector<8x32xf32>
    %92 = arith.negf %91 : vector<8x32xf32>
    %93 = math.exp %92 : vector<8x32xf32>
    %cst_23 = arith.constant 1.000000e+00 : f32
    %94 = vector.broadcast %cst_23 : f32 to vector<8x32xf32>
    %95 = arith.addf %94, %93 : vector<8x32xf32>
    %96 = arith.divf %94, %95 : vector<8x32xf32>
    %97 = arith.mulf %88, %39 : vector<8x32xf32>
    %98 = arith.mulf %82, %90 : vector<8x32xf32>
    %99 = arith.addf %97, %98 : vector<8x32xf32>
    %100 = math.tanh %99 : vector<8x32xf32>
    %101 = arith.mulf %96, %100 : vector<8x32xf32>
    %102 = vector.extract_strided_slice %76 {offsets = [0, 0], sizes = [8, 32], strides = [1, 1]} : vector<8x128xf32> to vector<8x32xf32>
    %103 = arith.negf %102 : vector<8x32xf32>
    %104 = math.exp %103 : vector<8x32xf32>
    %cst_24 = arith.constant 1.000000e+00 : f32
    %105 = vector.broadcast %cst_24 : f32 to vector<8x32xf32>
    %106 = arith.addf %105, %104 : vector<8x32xf32>
    %107 = arith.divf %105, %106 : vector<8x32xf32>
    %108 = vector.extract_strided_slice %76 {offsets = [0, 32], sizes = [8, 32], strides = [1, 1]} : vector<8x128xf32> to vector<8x32xf32>
    %109 = arith.negf %108 : vector<8x32xf32>
    %110 = math.exp %109 : vector<8x32xf32>
    %cst_25 = arith.constant 1.000000e+00 : f32
    %111 = vector.broadcast %cst_25 : f32 to vector<8x32xf32>
    %112 = arith.addf %111, %110 : vector<8x32xf32>
    %113 = arith.divf %111, %112 : vector<8x32xf32>
    %114 = vector.extract_strided_slice %76 {offsets = [0, 64], sizes = [8, 32], strides = [1, 1]} : vector<8x128xf32> to vector<8x32xf32>
    %115 = math.tanh %114 : vector<8x32xf32>
    %116 = vector.extract_strided_slice %76 {offsets = [0, 96], sizes = [8, 32], strides = [1, 1]} : vector<8x128xf32> to vector<8x32xf32>
    %117 = arith.negf %116 : vector<8x32xf32>
    %118 = math.exp %117 : vector<8x32xf32>
    %cst_26 = arith.constant 1.000000e+00 : f32
    %119 = vector.broadcast %cst_26 : f32 to vector<8x32xf32>
    %120 = arith.addf %119, %118 : vector<8x32xf32>
    %121 = arith.divf %119, %120 : vector<8x32xf32>
    %122 = arith.mulf %113, %64 : vector<8x32xf32>
    %123 = arith.mulf %107, %115 : vector<8x32xf32>
    %124 = arith.addf %122, %123 : vector<8x32xf32>
    %125 = math.tanh %124 : vector<8x32xf32>
    %126 = arith.mulf %121, %125 : vector<8x32xf32>
    %127 = tpu.concatenate %101, %126 in 1 : vector<8x32xf32>, vector<8x32xf32> -> vector<8x64xf32>
    %c8 = arith.constant 8 : index
    %c0_27 = arith.constant 0 : index
    %128 = vector.load %arg9[%c8, %c0_27] : memref<64x32xf32, #tpu.memory_space<vmem>>, vector<8x32xf32>
    tpu.vector_store %arg9[%c8, %c0_27], %101 {strides = array<i32>} : memref<64x32xf32, #tpu.memory_space<vmem>>, vector<8x32xf32>,
    %c48 = arith.constant 48 : index
    %c0_28 = arith.constant 0 : index
    %129 = vector.load %arg10[%c48, %c0_28] : memref<64x32xf32, #tpu.memory_space<vmem>>, vector<8x32xf32>
    tpu.vector_store %arg10[%c48, %c0_28], %126 {strides = array<i32>} : memref<64x32xf32, #tpu.memory_space<vmem>>, vector<8x32xf32>,
    %cst_29 = arith.constant dense<0.000000e+00> : vector<8x256xf32>
    %130 = tpu.matmul %127, %6, %cst_29 {dimension_numbers = #tpu.dot_dimension_numbers<[1], [0], [0], [1], [0, 0, 1, 1], [], []>} : vector<8x64xf32>, vector<64x256xf32>, vector<8x256xf32> -> vector<8x256xf32>
    %131 = vector.extract_strided_slice %130 {offsets = [0, 0], sizes = [8, 128], strides = [1, 1]} : vector<8x256xf32> to vector<8x128xf32>
    %132 = vector.extract_strided_slice %5 {offsets = [16, 0], sizes = [8, 128], strides = [1, 1]} : vector<64x256xf32> to vector<8x128xf32>
    %133 = arith.addf %131, %132 : vector<8x128xf32>
    %134 = vector.extract_strided_slice %130 {offsets = [0, 128], sizes = [8, 128], strides = [1, 1]} : vector<8x256xf32> to vector<8x128xf32>
    %135 = vector.extract_strided_slice %5 {offsets = [40, 128], sizes = [8, 128], strides = [1, 1]} : vector<64x256xf32> to vector<8x128xf32>
    %136 = arith.addf %134, %135 : vector<8x128xf32>
    %137 = vector.extract_strided_slice %133 {offsets = [0, 0], sizes = [8, 32], strides = [1, 1]} : vector<8x128xf32> to vector<8x32xf32>
    %138 = arith.negf %137 : vector<8x32xf32>
    %139 = math.exp %138 : vector<8x32xf32>
    %cst_30 = arith.constant 1.000000e+00 : f32
    %140 = vector.broadcast %cst_30 : f32 to vector<8x32xf32>
    %141 = arith.addf %140, %139 : vector<8x32xf32>
    %142 = arith.divf %140, %141 : vector<8x32xf32>
    %143 = vector.extract_strided_slice %133 {offsets = [0, 32], sizes = [8, 32], strides = [1, 1]} : vector<8x128xf32> to vector<8x32xf32>
    %144 = arith.negf %143 : vector<8x32xf32>
    %145 = math.exp %144 : vector<8x32xf32>
    %cst_31 = arith.constant 1.000000e+00 : f32
    %146 = vector.broadcast %cst_31 : f32 to vector<8x32xf32>
    %147 = arith.addf %146, %145 : vector<8x32xf32>
    %148 = arith.divf %146, %147 : vector<8x32xf32>
    %149 = vector.extract_strided_slice %133 {offsets = [0, 64], sizes = [8, 32], strides = [1, 1]} : vector<8x128xf32> to vector<8x32xf32>
    %150 = math.tanh %149 : vector<8x32xf32>
    %151 = vector.extract_strided_slice %133 {offsets = [0, 96], sizes = [8, 32], strides = [1, 1]} : vector<8x128xf32> to vector<8x32xf32>
    %152 = arith.negf %151 : vector<8x32xf32>
    %153 = math.exp %152 : vector<8x32xf32>
    %cst_32 = arith.constant 1.000000e+00 : f32
    %154 = vector.broadcast %cst_32 : f32 to vector<8x32xf32>
    %155 = arith.addf %154, %153 : vector<8x32xf32>
    %156 = arith.divf %154, %155 : vector<8x32xf32>
    %157 = arith.mulf %148, %99 : vector<8x32xf32>
    %158 = arith.mulf %142, %150 : vector<8x32xf32>
    %159 = arith.addf %157, %158 : vector<8x32xf32>
    %160 = math.tanh %159 : vector<8x32xf32>
    %161 = arith.mulf %156, %160 : vector<8x32xf32>
    %162 = vector.extract_strided_slice %136 {offsets = [0, 0], sizes = [8, 32], strides = [1, 1]} : vector<8x128xf32> to vector<8x32xf32>
    %163 = arith.negf %162 : vector<8x32xf32>
    %164 = math.exp %163 : vector<8x32xf32>
    %cst_33 = arith.constant 1.000000e+00 : f32
    %165 = vector.broadcast %cst_33 : f32 to vector<8x32xf32>
    %166 = arith.addf %165, %164 : vector<8x32xf32>
    %167 = arith.divf %165, %166 : vector<8x32xf32>
    %168 = vector.extract_strided_slice %136 {offsets = [0, 32], sizes = [8, 32], strides = [1, 1]} : vector<8x128xf32> to vector<8x32xf32>
    %169 = arith.negf %168 : vector<8x32xf32>
    %170 = math.exp %169 : vector<8x32xf32>
    %cst_34 = arith.constant 1.000000e+00 : f32
    %171 = vector.broadcast %cst_34 : f32 to vector<8x32xf32>
    %172 = arith.addf %171, %170 : vector<8x32xf32>
    %173 = arith.divf %171, %172 : vector<8x32xf32>
    %174 = vector.extract_strided_slice %136 {offsets = [0, 64], sizes = [8, 32], strides = [1, 1]} : vector<8x128xf32> to vector<8x32xf32>
    %175 = math.tanh %174 : vector<8x32xf32>
    %176 = vector.extract_strided_slice %136 {offsets = [0, 96], sizes = [8, 32], strides = [1, 1]} : vector<8x128xf32> to vector<8x32xf32>
    %177 = arith.negf %176 : vector<8x32xf32>
    %178 = math.exp %177 : vector<8x32xf32>
    %cst_35 = arith.constant 1.000000e+00 : f32
    %179 = vector.broadcast %cst_35 : f32 to vector<8x32xf32>
    %180 = arith.addf %179, %178 : vector<8x32xf32>
    %181 = arith.divf %179, %180 : vector<8x32xf32>
    %182 = arith.mulf %173, %124 : vector<8x32xf32>
    %183 = arith.mulf %167, %175 : vector<8x32xf32>
    %184 = arith.addf %182, %183 : vector<8x32xf32>
    %185 = math.tanh %184 : vector<8x32xf32>
    %186 = arith.mulf %181, %185 : vector<8x32xf32>
    %187 = tpu.concatenate %161, %186 in 1 : vector<8x32xf32>, vector<8x32xf32> -> vector<8x64xf32>
    %c16 = arith.constant 16 : index
    %c0_36 = arith.constant 0 : index
    %188 = vector.load %arg9[%c16, %c0_36] : memref<64x32xf32, #tpu.memory_space<vmem>>, vector<8x32xf32>
    tpu.vector_store %arg9[%c16, %c0_36], %161 {strides = array<i32>} : memref<64x32xf32, #tpu.memory_space<vmem>>, vector<8x32xf32>,
    %c40 = arith.constant 40 : index
    %c0_37 = arith.constant 0 : index
    %189 = vector.load %arg10[%c40, %c0_37] : memref<64x32xf32, #tpu.memory_space<vmem>>, vector<8x32xf32>
    tpu.vector_store %arg10[%c40, %c0_37], %186 {strides = array<i32>} : memref<64x32xf32, #tpu.memory_space<vmem>>, vector<8x32xf32>,
    %cst_38 = arith.constant dense<0.000000e+00> : vector<8x256xf32>
    %190 = tpu.matmul %187, %6, %cst_38 {dimension_numbers = #tpu.dot_dimension_numbers<[1], [0], [0], [1], [0, 0, 1, 1], [], []>} : vector<8x64xf32>, vector<64x256xf32>, vector<8x256xf32> -> vector<8x256xf32>
    %191 = vector.extract_strided_slice %190 {offsets = [0, 0], sizes = [8, 128], strides = [1, 1]} : vector<8x256xf32> to vector<8x128xf32>
    %192 = vector.extract_strided_slice %5 {offsets = [24, 0], sizes = [8, 128], strides = [1, 1]} : vector<64x256xf32> to vector<8x128xf32>
    %193 = arith.addf %191, %192 : vector<8x128xf32>
    %194 = vector.extract_strided_slice %190 {offsets = [0, 128], sizes = [8, 128], strides = [1, 1]} : vector<8x256xf32> to vector<8x128xf32>
    %195 = vector.extract_strided_slice %5 {offsets = [32, 128], sizes = [8, 128], strides = [1, 1]} : vector<64x256xf32> to vector<8x128xf32>
    %196 = arith.addf %194, %195 : vector<8x128xf32>
    %197 = vector.extract_strided_slice %193 {offsets = [0, 0], sizes = [8, 32], strides = [1, 1]} : vector<8x128xf32> to vector<8x32xf32>
    %198 = arith.negf %197 : vector<8x32xf32>
    %199 = math.exp %198 : vector<8x32xf32>
    %cst_39 = arith.constant 1.000000e+00 : f32
    %200 = vector.broadcast %cst_39 : f32 to vector<8x32xf32>
    %201 = arith.addf %200, %199 : vector<8x32xf32>
    %202 = arith.divf %200, %201 : vector<8x32xf32>
    %203 = vector.extract_strided_slice %193 {offsets = [0, 32], sizes = [8, 32], strides = [1, 1]} : vector<8x128xf32> to vector<8x32xf32>
    %204 = arith.negf %203 : vector<8x32xf32>
    %205 = math.exp %204 : vector<8x32xf32>
    %cst_40 = arith.constant 1.000000e+00 : f32
    %206 = vector.broadcast %cst_40 : f32 to vector<8x32xf32>
    %207 = arith.addf %206, %205 : vector<8x32xf32>
    %208 = arith.divf %206, %207 : vector<8x32xf32>
    %209 = vector.extract_strided_slice %193 {offsets = [0, 64], sizes = [8, 32], strides = [1, 1]} : vector<8x128xf32> to vector<8x32xf32>
    %210 = math.tanh %209 : vector<8x32xf32>
    %211 = vector.extract_strided_slice %193 {offsets = [0, 96], sizes = [8, 32], strides = [1, 1]} : vector<8x128xf32> to vector<8x32xf32>
    %212 = arith.negf %211 : vector<8x32xf32>
    %213 = math.exp %212 : vector<8x32xf32>
    %cst_41 = arith.constant 1.000000e+00 : f32
    %214 = vector.broadcast %cst_41 : f32 to vector<8x32xf32>
    %215 = arith.addf %214, %213 : vector<8x32xf32>
    %216 = arith.divf %214, %215 : vector<8x32xf32>
    %217 = arith.mulf %208, %159 : vector<8x32xf32>
    %218 = arith.mulf %202, %210 : vector<8x32xf32>
    %219 = arith.addf %217, %218 : vector<8x32xf32>
    %220 = math.tanh %219 : vector<8x32xf32>
    %221 = arith.mulf %216, %220 : vector<8x32xf32>
    %222 = vector.extract_strided_slice %196 {offsets = [0, 0], sizes = [8, 32], strides = [1, 1]} : vector<8x128xf32> to vector<8x32xf32>
    %223 = arith.negf %222 : vector<8x32xf32>
    %224 = math.exp %223 : vector<8x32xf32>
    %cst_42 = arith.constant 1.000000e+00 : f32
    %225 = vector.broadcast %cst_42 : f32 to vector<8x32xf32>
    %226 = arith.addf %225, %224 : vector<8x32xf32>
    %227 = arith.divf %225, %226 : vector<8x32xf32>
    %228 = vector.extract_strided_slice %196 {offsets = [0, 32], sizes = [8, 32], strides = [1, 1]} : vector<8x128xf32> to vector<8x32xf32>
    %229 = arith.negf %228 : vector<8x32xf32>
    %230 = math.exp %229 : vector<8x32xf32>
    %cst_43 = arith.constant 1.000000e+00 : f32
    %231 = vector.broadcast %cst_43 : f32 to vector<8x32xf32>
    %232 = arith.addf %231, %230 : vector<8x32xf32>
    %233 = arith.divf %231, %232 : vector<8x32xf32>
    %234 = vector.extract_strided_slice %196 {offsets = [0, 64], sizes = [8, 32], strides = [1, 1]} : vector<8x128xf32> to vector<8x32xf32>
    %235 = math.tanh %234 : vector<8x32xf32>
    %236 = vector.extract_strided_slice %196 {offsets = [0, 96], sizes = [8, 32], strides = [1, 1]} : vector<8x128xf32> to vector<8x32xf32>
    %237 = arith.negf %236 : vector<8x32xf32>
    %238 = math.exp %237 : vector<8x32xf32>
    %cst_44 = arith.constant 1.000000e+00 : f32
    %239 = vector.broadcast %cst_44 : f32 to vector<8x32xf32>
    %240 = arith.addf %239, %238 : vector<8x32xf32>
    %241 = arith.divf %239, %240 : vector<8x32xf32>
    %242 = arith.mulf %233, %184 : vector<8x32xf32>
    %243 = arith.mulf %227, %235 : vector<8x32xf32>
    %244 = arith.addf %242, %243 : vector<8x32xf32>
    %245 = math.tanh %244 : vector<8x32xf32>
    %246 = arith.mulf %241, %245 : vector<8x32xf32>
    %247 = tpu.concatenate %221, %246 in 1 : vector<8x32xf32>, vector<8x32xf32> -> vector<8x64xf32>
    %c24 = arith.constant 24 : index
    %c0_45 = arith.constant 0 : index
    %248 = vector.load %arg9[%c24, %c0_45] : memref<64x32xf32, #tpu.memory_space<vmem>>, vector<8x32xf32>
    tpu.vector_store %arg9[%c24, %c0_45], %221 {strides = array<i32>} : memref<64x32xf32, #tpu.memory_space<vmem>>, vector<8x32xf32>,
    %c32 = arith.constant 32 : index
    %c0_46 = arith.constant 0 : index
    %249 = vector.load %arg10[%c32, %c0_46] : memref<64x32xf32, #tpu.memory_space<vmem>>, vector<8x32xf32>
    tpu.vector_store %arg10[%c32, %c0_46], %246 {strides = array<i32>} : memref<64x32xf32, #tpu.memory_space<vmem>>, vector<8x32xf32>,
    %cst_47 = arith.constant dense<0.000000e+00> : vector<8x256xf32>
    %250 = tpu.matmul %247, %6, %cst_47 {dimension_numbers = #tpu.dot_dimension_numbers<[1], [0], [0], [1], [0, 0, 1, 1], [], []>} : vector<8x64xf32>, vector<64x256xf32>, vector<8x256xf32> -> vector<8x256xf32>
    %251 = vector.extract_strided_slice %250 {offsets = [0, 0], sizes = [8, 128], strides = [1, 1]} : vector<8x256xf32> to vector<8x128xf32>
    %252 = vector.extract_strided_slice %5 {offsets = [32, 0], sizes = [8, 128], strides = [1, 1]} : vector<64x256xf32> to vector<8x128xf32>
    %253 = arith.addf %251, %252 : vector<8x128xf32>
    %254 = vector.extract_strided_slice %250 {offsets = [0, 128], sizes = [8, 128], strides = [1, 1]} : vector<8x256xf32> to vector<8x128xf32>
    %255 = vector.extract_strided_slice %5 {offsets = [24, 128], sizes = [8, 128], strides = [1, 1]} : vector<64x256xf32> to vector<8x128xf32>
    %256 = arith.addf %254, %255 : vector<8x128xf32>
    %257 = vector.extract_strided_slice %253 {offsets = [0, 0], sizes = [8, 32], strides = [1, 1]} : vector<8x128xf32> to vector<8x32xf32>
    %258 = arith.negf %257 : vector<8x32xf32>
    %259 = math.exp %258 : vector<8x32xf32>
    %cst_48 = arith.constant 1.000000e+00 : f32
    %260 = vector.broadcast %cst_48 : f32 to vector<8x32xf32>
    %261 = arith.addf %260, %259 : vector<8x32xf32>
    %262 = arith.divf %260, %261 : vector<8x32xf32>
    %263 = vector.extract_strided_slice %253 {offsets = [0, 32], sizes = [8, 32], strides = [1, 1]} : vector<8x128xf32> to vector<8x32xf32>
    %264 = arith.negf %263 : vector<8x32xf32>
    %265 = math.exp %264 : vector<8x32xf32>
    %cst_49 = arith.constant 1.000000e+00 : f32
    %266 = vector.broadcast %cst_49 : f32 to vector<8x32xf32>
    %267 = arith.addf %266, %265 : vector<8x32xf32>
    %268 = arith.divf %266, %267 : vector<8x32xf32>
    %269 = vector.extract_strided_slice %253 {offsets = [0, 64], sizes = [8, 32], strides = [1, 1]} : vector<8x128xf32> to vector<8x32xf32>
    %270 = math.tanh %269 : vector<8x32xf32>
    %271 = vector.extract_strided_slice %253 {offsets = [0, 96], sizes = [8, 32], strides = [1, 1]} : vector<8x128xf32> to vector<8x32xf32>
    %272 = arith.negf %271 : vector<8x32xf32>
    %273 = math.exp %272 : vector<8x32xf32>
    %cst_50 = arith.constant 1.000000e+00 : f32
    %274 = vector.broadcast %cst_50 : f32 to vector<8x32xf32>
    %275 = arith.addf %274, %273 : vector<8x32xf32>
    %276 = arith.divf %274, %275 : vector<8x32xf32>
    %277 = arith.mulf %268, %219 : vector<8x32xf32>
    %278 = arith.mulf %262, %270 : vector<8x32xf32>
    %279 = arith.addf %277, %278 : vector<8x32xf32>
    %280 = math.tanh %279 : vector<8x32xf32>
    %281 = arith.mulf %276, %280 : vector<8x32xf32>
    %282 = vector.extract_strided_slice %256 {offsets = [0, 0], sizes = [8, 32], strides = [1, 1]} : vector<8x128xf32> to vector<8x32xf32>
    %283 = arith.negf %282 : vector<8x32xf32>
    %284 = math.exp %283 : vector<8x32xf32>
    %cst_51 = arith.constant 1.000000e+00 : f32
    %285 = vector.broadcast %cst_51 : f32 to vector<8x32xf32>
    %286 = arith.addf %285, %284 : vector<8x32xf32>
    %287 = arith.divf %285, %286 : vector<8x32xf32>
    %288 = vector.extract_strided_slice %256 {offsets = [0, 32], sizes = [8, 32], strides = [1, 1]} : vector<8x128xf32> to vector<8x32xf32>
    %289 = arith.negf %288 : vector<8x32xf32>
    %290 = math.exp %289 : vector<8x32xf32>
    %cst_52 = arith.constant 1.000000e+00 : f32
    %291 = vector.broadcast %cst_52 : f32 to vector<8x32xf32>
    %292 = arith.addf %291, %290 : vector<8x32xf32>
    %293 = arith.divf %291, %292 : vector<8x32xf32>
    %294 = vector.extract_strided_slice %256 {offsets = [0, 64], sizes = [8, 32], strides = [1, 1]} : vector<8x128xf32> to vector<8x32xf32>
    %295 = math.tanh %294 : vector<8x32xf32>
    %296 = vector.extract_strided_slice %256 {offsets = [0, 96], sizes = [8, 32], strides = [1, 1]} : vector<8x128xf32> to vector<8x32xf32>
    %297 = arith.negf %296 : vector<8x32xf32>
    %298 = math.exp %297 : vector<8x32xf32>
    %cst_53 = arith.constant 1.000000e+00 : f32
    %299 = vector.broadcast %cst_53 : f32 to vector<8x32xf32>
    %300 = arith.addf %299, %298 : vector<8x32xf32>
    %301 = arith.divf %299, %300 : vector<8x32xf32>
    %302 = arith.mulf %293, %244 : vector<8x32xf32>
    %303 = arith.mulf %287, %295 : vector<8x32xf32>
    %304 = arith.addf %302, %303 : vector<8x32xf32>
    %305 = math.tanh %304 : vector<8x32xf32>
    %306 = arith.mulf %301, %305 : vector<8x32xf32>
    %307 = tpu.concatenate %281, %306 in 1 : vector<8x32xf32>, vector<8x32xf32> -> vector<8x64xf32>
    %c32_54 = arith.constant 32 : index
    %c0_55 = arith.constant 0 : index
    %308 = vector.load %arg9[%c32_54, %c0_55] : memref<64x32xf32, #tpu.memory_space<vmem>>, vector<8x32xf32>
    tpu.vector_store %arg9[%c32_54, %c0_55], %281 {strides = array<i32>} : memref<64x32xf32, #tpu.memory_space<vmem>>, vector<8x32xf32>,
    %c24_56 = arith.constant 24 : index
    %c0_57 = arith.constant 0 : index
    %309 = vector.load %arg10[%c24_56, %c0_57] : memref<64x32xf32, #tpu.memory_space<vmem>>, vector<8x32xf32>
    tpu.vector_store %arg10[%c24_56, %c0_57], %306 {strides = array<i32>} : memref<64x32xf32, #tpu.memory_space<vmem>>, vector<8x32xf32>,
    %cst_58 = arith.constant dense<0.000000e+00> : vector<8x256xf32>
    %310 = tpu.matmul %307, %6, %cst_58 {dimension_numbers = #tpu.dot_dimension_numbers<[1], [0], [0], [1], [0, 0, 1, 1], [], []>} : vector<8x64xf32>, vector<64x256xf32>, vector<8x256xf32> -> vector<8x256xf32>
    %311 = vector.extract_strided_slice %310 {offsets = [0, 0], sizes = [8, 128], strides = [1, 1]} : vector<8x256xf32> to vector<8x128xf32>
    %312 = vector.extract_strided_slice %5 {offsets = [40, 0], sizes = [8, 128], strides = [1, 1]} : vector<64x256xf32> to vector<8x128xf32>
    %313 = arith.addf %311, %312 : vector<8x128xf32>
    %314 = vector.extract_strided_slice %310 {offsets = [0, 128], sizes = [8, 128], strides = [1, 1]} : vector<8x256xf32> to vector<8x128xf32>
    %315 = vector.extract_strided_slice %5 {offsets = [16, 128], sizes = [8, 128], strides = [1, 1]} : vector<64x256xf32> to vector<8x128xf32>
    %316 = arith.addf %314, %315 : vector<8x128xf32>
    %317 = vector.extract_strided_slice %313 {offsets = [0, 0], sizes = [8, 32], strides = [1, 1]} : vector<8x128xf32> to vector<8x32xf32>
    %318 = arith.negf %317 : vector<8x32xf32>
    %319 = math.exp %318 : vector<8x32xf32>
    %cst_59 = arith.constant 1.000000e+00 : f32
    %320 = vector.broadcast %cst_59 : f32 to vector<8x32xf32>
    %321 = arith.addf %320, %319 : vector<8x32xf32>
    %322 = arith.divf %320, %321 : vector<8x32xf32>
    %323 = vector.extract_strided_slice %313 {offsets = [0, 32], sizes = [8, 32], strides = [1, 1]} : vector<8x128xf32> to vector<8x32xf32>
    %324 = arith.negf %323 : vector<8x32xf32>
    %325 = math.exp %324 : vector<8x32xf32>
    %cst_60 = arith.constant 1.000000e+00 : f32
    %326 = vector.broadcast %cst_60 : f32 to vector<8x32xf32>
    %327 = arith.addf %326, %325 : vector<8x32xf32>
    %328 = arith.divf %326, %327 : vector<8x32xf32>
    %329 = vector.extract_strided_slice %313 {offsets = [0, 64], sizes = [8, 32], strides = [1, 1]} : vector<8x128xf32> to vector<8x32xf32>
    %330 = math.tanh %329 : vector<8x32xf32>
    %331 = vector.extract_strided_slice %313 {offsets = [0, 96], sizes = [8, 32], strides = [1, 1]} : vector<8x128xf32> to vector<8x32xf32>
    %332 = arith.negf %331 : vector<8x32xf32>
    %333 = math.exp %332 : vector<8x32xf32>
    %cst_61 = arith.constant 1.000000e+00 : f32
    %334 = vector.broadcast %cst_61 : f32 to vector<8x32xf32>
    %335 = arith.addf %334, %333 : vector<8x32xf32>
    %336 = arith.divf %334, %335 : vector<8x32xf32>
    %337 = arith.mulf %328, %279 : vector<8x32xf32>
    %338 = arith.mulf %322, %330 : vector<8x32xf32>
    %339 = arith.addf %337, %338 : vector<8x32xf32>
    %340 = math.tanh %339 : vector<8x32xf32>
    %341 = arith.mulf %336, %340 : vector<8x32xf32>
    %342 = vector.extract_strided_slice %316 {offsets = [0, 0], sizes = [8, 32], strides = [1, 1]} : vector<8x128xf32> to vector<8x32xf32>
    %343 = arith.negf %342 : vector<8x32xf32>
    %344 = math.exp %343 : vector<8x32xf32>
    %cst_62 = arith.constant 1.000000e+00 : f32
    %345 = vector.broadcast %cst_62 : f32 to vector<8x32xf32>
    %346 = arith.addf %345, %344 : vector<8x32xf32>
    %347 = arith.divf %345, %346 : vector<8x32xf32>
    %348 = vector.extract_strided_slice %316 {offsets = [0, 32], sizes = [8, 32], strides = [1, 1]} : vector<8x128xf32> to vector<8x32xf32>
    %349 = arith.negf %348 : vector<8x32xf32>
    %350 = math.exp %349 : vector<8x32xf32>
    %cst_63 = arith.constant 1.000000e+00 : f32
    %351 = vector.broadcast %cst_63 : f32 to vector<8x32xf32>
    %352 = arith.addf %351, %350 : vector<8x32xf32>
    %353 = arith.divf %351, %352 : vector<8x32xf32>
    %354 = vector.extract_strided_slice %316 {offsets = [0, 64], sizes = [8, 32], strides = [1, 1]} : vector<8x128xf32> to vector<8x32xf32>
    %355 = math.tanh %354 : vector<8x32xf32>
    %356 = vector.extract_strided_slice %316 {offsets = [0, 96], sizes = [8, 32], strides = [1, 1]} : vector<8x128xf32> to vector<8x32xf32>
    %357 = arith.negf %356 : vector<8x32xf32>
    %358 = math.exp %357 : vector<8x32xf32>
    %cst_64 = arith.constant 1.000000e+00 : f32
    %359 = vector.broadcast %cst_64 : f32 to vector<8x32xf32>
    %360 = arith.addf %359, %358 : vector<8x32xf32>
    %361 = arith.divf %359, %360 : vector<8x32xf32>
    %362 = arith.mulf %353, %304 : vector<8x32xf32>
    %363 = arith.mulf %347, %355 : vector<8x32xf32>
    %364 = arith.addf %362, %363 : vector<8x32xf32>
    %365 = math.tanh %364 : vector<8x32xf32>
    %366 = arith.mulf %361, %365 : vector<8x32xf32>
    %367 = tpu.concatenate %341, %366 in 1 : vector<8x32xf32>, vector<8x32xf32> -> vector<8x64xf32>
    %c40_65 = arith.constant 40 : index
    %c0_66 = arith.constant 0 : index
    %368 = vector.load %arg9[%c40_65, %c0_66] : memref<64x32xf32, #tpu.memory_space<vmem>>, vector<8x32xf32>
    tpu.vector_store %arg9[%c40_65, %c0_66], %341 {strides = array<i32>} : memref<64x32xf32, #tpu.memory_space<vmem>>, vector<8x32xf32>,
    %c16_67 = arith.constant 16 : index
    %c0_68 = arith.constant 0 : index
    %369 = vector.load %arg10[%c16_67, %c0_68] : memref<64x32xf32, #tpu.memory_space<vmem>>, vector<8x32xf32>
    tpu.vector_store %arg10[%c16_67, %c0_68], %366 {strides = array<i32>} : memref<64x32xf32, #tpu.memory_space<vmem>>, vector<8x32xf32>,
    %cst_69 = arith.constant dense<0.000000e+00> : vector<8x256xf32>
    %370 = tpu.matmul %367, %6, %cst_69 {dimension_numbers = #tpu.dot_dimension_numbers<[1], [0], [0], [1], [0, 0, 1, 1], [], []>} : vector<8x64xf32>, vector<64x256xf32>, vector<8x256xf32> -> vector<8x256xf32>
    %371 = vector.extract_strided_slice %370 {offsets = [0, 0], sizes = [8, 128], strides = [1, 1]} : vector<8x256xf32> to vector<8x128xf32>
    %372 = vector.extract_strided_slice %5 {offsets = [48, 0], sizes = [8, 128], strides = [1, 1]} : vector<64x256xf32> to vector<8x128xf32>
    %373 = arith.addf %371, %372 : vector<8x128xf32>
    %374 = vector.extract_strided_slice %370 {offsets = [0, 128], sizes = [8, 128], strides = [1, 1]} : vector<8x256xf32> to vector<8x128xf32>
    %375 = vector.extract_strided_slice %5 {offsets = [8, 128], sizes = [8, 128], strides = [1, 1]} : vector<64x256xf32> to vector<8x128xf32>
    %376 = arith.addf %374, %375 : vector<8x128xf32>
    %377 = vector.extract_strided_slice %373 {offsets = [0, 0], sizes = [8, 32], strides = [1, 1]} : vector<8x128xf32> to vector<8x32xf32>
    %378 = arith.negf %377 : vector<8x32xf32>
    %379 = math.exp %378 : vector<8x32xf32>
    %cst_70 = arith.constant 1.000000e+00 : f32
    %380 = vector.broadcast %cst_70 : f32 to vector<8x32xf32>
    %381 = arith.addf %380, %379 : vector<8x32xf32>
    %382 = arith.divf %380, %381 : vector<8x32xf32>
    %383 = vector.extract_strided_slice %373 {offsets = [0, 32], sizes = [8, 32], strides = [1, 1]} : vector<8x128xf32> to vector<8x32xf32>
    %384 = arith.negf %383 : vector<8x32xf32>
    %385 = math.exp %384 : vector<8x32xf32>
    %cst_71 = arith.constant 1.000000e+00 : f32
    %386 = vector.broadcast %cst_71 : f32 to vector<8x32xf32>
    %387 = arith.addf %386, %385 : vector<8x32xf32>
    %388 = arith.divf %386, %387 : vector<8x32xf32>
    %389 = vector.extract_strided_slice %373 {offsets = [0, 64], sizes = [8, 32], strides = [1, 1]} : vector<8x128xf32> to vector<8x32xf32>
    %390 = math.tanh %389 : vector<8x32xf32>
    %391 = vector.extract_strided_slice %373 {offsets = [0, 96], sizes = [8, 32], strides = [1, 1]} : vector<8x128xf32> to vector<8x32xf32>
    %392 = arith.negf %391 : vector<8x32xf32>
    %393 = math.exp %392 : vector<8x32xf32>
    %cst_72 = arith.constant 1.000000e+00 : f32
    %394 = vector.broadcast %cst_72 : f32 to vector<8x32xf32>
    %395 = arith.addf %394, %393 : vector<8x32xf32>
    %396 = arith.divf %394, %395 : vector<8x32xf32>
    %397 = arith.mulf %388, %339 : vector<8x32xf32>
    %398 = arith.mulf %382, %390 : vector<8x32xf32>
    %399 = arith.addf %397, %398 : vector<8x32xf32>
    %400 = math.tanh %399 : vector<8x32xf32>
    %401 = arith.mulf %396, %400 : vector<8x32xf32>
    %402 = vector.extract_strided_slice %376 {offsets = [0, 0], sizes = [8, 32], strides = [1, 1]} : vector<8x128xf32> to vector<8x32xf32>
    %403 = arith.negf %402 : vector<8x32xf32>
    %404 = math.exp %403 : vector<8x32xf32>
    %cst_73 = arith.constant 1.000000e+00 : f32
    %405 = vector.broadcast %cst_73 : f32 to vector<8x32xf32>
    %406 = arith.addf %405, %404 : vector<8x32xf32>
    %407 = arith.divf %405, %406 : vector<8x32xf32>
    %408 = vector.extract_strided_slice %376 {offsets = [0, 32], sizes = [8, 32], strides = [1, 1]} : vector<8x128xf32> to vector<8x32xf32>
    %409 = arith.negf %408 : vector<8x32xf32>
    %410 = math.exp %409 : vector<8x32xf32>
    %cst_74 = arith.constant 1.000000e+00 : f32
    %411 = vector.broadcast %cst_74 : f32 to vector<8x32xf32>
    %412 = arith.addf %411, %410 : vector<8x32xf32>
    %413 = arith.divf %411, %412 : vector<8x32xf32>
    %414 = vector.extract_strided_slice %376 {offsets = [0, 64], sizes = [8, 32], strides = [1, 1]} : vector<8x128xf32> to vector<8x32xf32>
    %415 = math.tanh %414 : vector<8x32xf32>
    %416 = vector.extract_strided_slice %376 {offsets = [0, 96], sizes = [8, 32], strides = [1, 1]} : vector<8x128xf32> to vector<8x32xf32>
    %417 = arith.negf %416 : vector<8x32xf32>
    %418 = math.exp %417 : vector<8x32xf32>
    %cst_75 = arith.constant 1.000000e+00 : f32
    %419 = vector.broadcast %cst_75 : f32 to vector<8x32xf32>
    %420 = arith.addf %419, %418 : vector<8x32xf32>
    %421 = arith.divf %419, %420 : vector<8x32xf32>
    %422 = arith.mulf %413, %364 : vector<8x32xf32>
    %423 = arith.mulf %407, %415 : vector<8x32xf32>
    %424 = arith.addf %422, %423 : vector<8x32xf32>
    %425 = math.tanh %424 : vector<8x32xf32>
    %426 = arith.mulf %421, %425 : vector<8x32xf32>
    %427 = tpu.concatenate %401, %426 in 1 : vector<8x32xf32>, vector<8x32xf32> -> vector<8x64xf32>
    %c48_76 = arith.constant 48 : index
    %c0_77 = arith.constant 0 : index
    %428 = vector.load %arg9[%c48_76, %c0_77] : memref<64x32xf32, #tpu.memory_space<vmem>>, vector<8x32xf32>
    tpu.vector_store %arg9[%c48_76, %c0_77], %401 {strides = array<i32>} : memref<64x32xf32, #tpu.memory_space<vmem>>, vector<8x32xf32>,
    %c8_78 = arith.constant 8 : index
    %c0_79 = arith.constant 0 : index
    %429 = vector.load %arg10[%c8_78, %c0_79] : memref<64x32xf32, #tpu.memory_space<vmem>>, vector<8x32xf32>
    tpu.vector_store %arg10[%c8_78, %c0_79], %426 {strides = array<i32>} : memref<64x32xf32, #tpu.memory_space<vmem>>, vector<8x32xf32>,
    %cst_80 = arith.constant dense<0.000000e+00> : vector<8x256xf32>
    %430 = tpu.matmul %427, %6, %cst_80 {dimension_numbers = #tpu.dot_dimension_numbers<[1], [0], [0], [1], [0, 0, 1, 1], [], []>} : vector<8x64xf32>, vector<64x256xf32>, vector<8x256xf32> -> vector<8x256xf32>
    %431 = vector.extract_strided_slice %430 {offsets = [0, 0], sizes = [8, 128], strides = [1, 1]} : vector<8x256xf32> to vector<8x128xf32>
    %432 = vector.extract_strided_slice %5 {offsets = [56, 0], sizes = [8, 128], strides = [1, 1]} : vector<64x256xf32> to vector<8x128xf32>
    %433 = arith.addf %431, %432 : vector<8x128xf32>
    %434 = vector.extract_strided_slice %430 {offsets = [0, 128], sizes = [8, 128], strides = [1, 1]} : vector<8x256xf32> to vector<8x128xf32>
    %435 = vector.extract_strided_slice %5 {offsets = [0, 128], sizes = [8, 128], strides = [1, 1]} : vector<64x256xf32> to vector<8x128xf32>
    %436 = arith.addf %434, %435 : vector<8x128xf32>
    %437 = vector.extract_strided_slice %433 {offsets = [0, 0], sizes = [8, 32], strides = [1, 1]} : vector<8x128xf32> to vector<8x32xf32>
    %438 = arith.negf %437 : vector<8x32xf32>
    %439 = math.exp %438 : vector<8x32xf32>
    %cst_81 = arith.constant 1.000000e+00 : f32
    %440 = vector.broadcast %cst_81 : f32 to vector<8x32xf32>
    %441 = arith.addf %440, %439 : vector<8x32xf32>
    %442 = arith.divf %440, %441 : vector<8x32xf32>
    %443 = vector.extract_strided_slice %433 {offsets = [0, 32], sizes = [8, 32], strides = [1, 1]} : vector<8x128xf32> to vector<8x32xf32>
    %444 = arith.negf %443 : vector<8x32xf32>
    %445 = math.exp %444 : vector<8x32xf32>
    %cst_82 = arith.constant 1.000000e+00 : f32
    %446 = vector.broadcast %cst_82 : f32 to vector<8x32xf32>
    %447 = arith.addf %446, %445 : vector<8x32xf32>
    %448 = arith.divf %446, %447 : vector<8x32xf32>
    %449 = vector.extract_strided_slice %433 {offsets = [0, 64], sizes = [8, 32], strides = [1, 1]} : vector<8x128xf32> to vector<8x32xf32>
    %450 = math.tanh %449 : vector<8x32xf32>
    %451 = vector.extract_strided_slice %433 {offsets = [0, 96], sizes = [8, 32], strides = [1, 1]} : vector<8x128xf32> to vector<8x32xf32>
    %452 = arith.negf %451 : vector<8x32xf32>
    %453 = math.exp %452 : vector<8x32xf32>
    %cst_83 = arith.constant 1.000000e+00 : f32
    %454 = vector.broadcast %cst_83 : f32 to vector<8x32xf32>
    %455 = arith.addf %454, %453 : vector<8x32xf32>
    %456 = arith.divf %454, %455 : vector<8x32xf32>
    %457 = arith.mulf %448, %399 : vector<8x32xf32>
    %458 = arith.mulf %442, %450 : vector<8x32xf32>
    %459 = arith.addf %457, %458 : vector<8x32xf32>
    %460 = math.tanh %459 : vector<8x32xf32>
    %461 = arith.mulf %456, %460 : vector<8x32xf32>
    %462 = vector.extract_strided_slice %436 {offsets = [0, 0], sizes = [8, 32], strides = [1, 1]} : vector<8x128xf32> to vector<8x32xf32>
    %463 = arith.negf %462 : vector<8x32xf32>
    %464 = math.exp %463 : vector<8x32xf32>
    %cst_84 = arith.constant 1.000000e+00 : f32
    %465 = vector.broadcast %cst_84 : f32 to vector<8x32xf32>
    %466 = arith.addf %465, %464 : vector<8x32xf32>
    %467 = arith.divf %465, %466 : vector<8x32xf32>
    %468 = vector.extract_strided_slice %436 {offsets = [0, 32], sizes = [8, 32], strides = [1, 1]} : vector<8x128xf32> to vector<8x32xf32>
    %469 = arith.negf %468 : vector<8x32xf32>
    %470 = math.exp %469 : vector<8x32xf32>
    %cst_85 = arith.constant 1.000000e+00 : f32
    %471 = vector.broadcast %cst_85 : f32 to vector<8x32xf32>
    %472 = arith.addf %471, %470 : vector<8x32xf32>
    %473 = arith.divf %471, %472 : vector<8x32xf32>
    %474 = vector.extract_strided_slice %436 {offsets = [0, 64], sizes = [8, 32], strides = [1, 1]} : vector<8x128xf32> to vector<8x32xf32>
    %475 = math.tanh %474 : vector<8x32xf32>
    %476 = vector.extract_strided_slice %436 {offsets = [0, 96], sizes = [8, 32], strides = [1, 1]} : vector<8x128xf32> to vector<8x32xf32>
    %477 = arith.negf %476 : vector<8x32xf32>
    %478 = math.exp %477 : vector<8x32xf32>
    %cst_86 = arith.constant 1.000000e+00 : f32
    %479 = vector.broadcast %cst_86 : f32 to vector<8x32xf32>
    %480 = arith.addf %479, %478 : vector<8x32xf32>
    %481 = arith.divf %479, %480 : vector<8x32xf32>
    %482 = arith.mulf %473, %424 : vector<8x32xf32>
    %483 = arith.mulf %467, %475 : vector<8x32xf32>
    %484 = arith.addf %482, %483 : vector<8x32xf32>
    %485 = math.tanh %484 : vector<8x32xf32>
    %486 = arith.mulf %481, %485 : vector<8x32xf32>
    %c56_87 = arith.constant 56 : index
    %c0_88 = arith.constant 0 : index
    %487 = vector.load %arg9[%c56_87, %c0_88] : memref<64x32xf32, #tpu.memory_space<vmem>>, vector<8x32xf32>
    tpu.vector_store %arg9[%c56_87, %c0_88], %461 {strides = array<i32>} : memref<64x32xf32, #tpu.memory_space<vmem>>, vector<8x32xf32>,
    %c0_89 = arith.constant 0 : index
    %c0_90 = arith.constant 0 : index
    %488 = vector.load %arg10[%c0_89, %c0_90] : memref<64x32xf32, #tpu.memory_space<vmem>>, vector<8x32xf32>
    tpu.vector_store %arg10[%c0_89, %c0_90], %486 {strides = array<i32>} : memref<64x32xf32, #tpu.memory_space<vmem>>, vector<8x32xf32>,
    %c0_91 = arith.constant 0 : index
    %c0_92 = arith.constant 0 : index
    %489 = vector.load %arg9[%c0_91, %c0_92] : memref<64x32xf32, #tpu.memory_space<vmem>>, vector<64x32xf32>
    %c0_93 = arith.constant 0 : index
    %c0_94 = arith.constant 0 : index
    %490 = vector.load %arg10[%c0_93, %c0_94] : memref<64x32xf32, #tpu.memory_space<vmem>>, vector<64x32xf32>
    %491 = tpu.concatenate %489, %490 in 1 : vector<64x32xf32>, vector<64x32xf32> -> vector<64x64xf32>
    %c0_95 = arith.constant 0 : index
    %c0_96 = arith.constant 0 : index
    %492 = vector.load %arg4[%c0_95, %c0_96] : memref<64x32xf32, #tpu.memory_space<vmem>>, vector<64x32xf32>
    %cst_97 = arith.constant dense<0.000000e+00> : vector<64x32xf32>
    %493 = tpu.matmul %491, %492, %cst_97 {dimension_numbers = #tpu.dot_dimension_numbers<[1], [0], [0], [1], [0, 0, 1, 1], [], []>} : vector<64x64xf32>, vector<64x32xf32>, vector<64x32xf32> -> vector<64x32xf32>
    %c0_98 = arith.constant 0 : index
    %c0_99 = arith.constant 0 : index
    %494 = vector.load %arg5[%c0_98, %c0_99] : memref<1x32xf32, #tpu.memory_space<vmem>>, vector<1x32xf32>
    %495 = vector.broadcast %494 : vector<1x32xf32> to vector<64x32xf32>
    %496 = arith.addf %493, %495 : vector<64x32xf32>
    %497 = math.tanh %496 : vector<64x32xf32>
    %c0_100 = arith.constant 0 : index
    %c0_101 = arith.constant 0 : index
    %498 = vector.load %arg6[%c0_100, %c0_101] : memref<32x32xf32, #tpu.memory_space<vmem>>, vector<32x32xf32>
    %cst_102 = arith.constant dense<0.000000e+00> : vector<64x32xf32>
    %499 = tpu.matmul %497, %498, %cst_102 {dimension_numbers = #tpu.dot_dimension_numbers<[1], [0], [0], [1], [0, 0, 1, 1], [], []>} : vector<64x32xf32>, vector<32x32xf32>, vector<64x32xf32> -> vector<64x32xf32>
    %c0_103 = arith.constant 0 : index
    %c0_104 = arith.constant 0 : index
    %500 = vector.load %arg7[%c0_103, %c0_104] : memref<1x32xf32, #tpu.memory_space<vmem>>, vector<1x32xf32>
    %501 = vector.broadcast %500 : vector<1x32xf32> to vector<64x32xf32>
    %502 = arith.addf %499, %501 : vector<64x32xf32>
    %503 = vector.extract_strided_slice %502 {offsets = [0, 0], sizes = [8, 32], strides = [1, 1]} : vector<64x32xf32> to vector<8x32xf32>
    %504 = vector.extract_strided_slice %502 {offsets = [8, 0], sizes = [8, 32], strides = [1, 1]} : vector<64x32xf32> to vector<8x32xf32>
    %505 = arith.maximumf %503, %504 : vector<8x32xf32>
    %506 = vector.extract_strided_slice %502 {offsets = [16, 0], sizes = [8, 32], strides = [1, 1]} : vector<64x32xf32> to vector<8x32xf32>
    %507 = arith.maximumf %505, %506 : vector<8x32xf32>
    %508 = vector.extract_strided_slice %502 {offsets = [24, 0], sizes = [8, 32], strides = [1, 1]} : vector<64x32xf32> to vector<8x32xf32>
    %509 = arith.maximumf %507, %508 : vector<8x32xf32>
    %510 = vector.extract_strided_slice %502 {offsets = [32, 0], sizes = [8, 32], strides = [1, 1]} : vector<64x32xf32> to vector<8x32xf32>
    %511 = arith.maximumf %509, %510 : vector<8x32xf32>
    %512 = vector.extract_strided_slice %502 {offsets = [40, 0], sizes = [8, 32], strides = [1, 1]} : vector<64x32xf32> to vector<8x32xf32>
    %513 = arith.maximumf %511, %512 : vector<8x32xf32>
    %514 = vector.extract_strided_slice %502 {offsets = [48, 0], sizes = [8, 32], strides = [1, 1]} : vector<64x32xf32> to vector<8x32xf32>
    %515 = arith.maximumf %513, %514 : vector<8x32xf32>
    %516 = vector.extract_strided_slice %502 {offsets = [56, 0], sizes = [8, 32], strides = [1, 1]} : vector<64x32xf32> to vector<8x32xf32>
    %517 = arith.maximumf %515, %516 : vector<8x32xf32>
    %cst_105 = arith.constant 0.000000e+00 : f32
    %518 = vector.broadcast %cst_105 : f32 to vector<8x32xf32>
    %519 = vector.extract_strided_slice %502 {offsets = [0, 0], sizes = [8, 32], strides = [1, 1]} : vector<64x32xf32> to vector<8x32xf32>
    %520 = arith.subf %519, %517 : vector<8x32xf32>
    %521 = math.exp %520 : vector<8x32xf32>
    %522 = arith.addf %518, %521 : vector<8x32xf32>
    %523 = vector.extract_strided_slice %502 {offsets = [8, 0], sizes = [8, 32], strides = [1, 1]} : vector<64x32xf32> to vector<8x32xf32>
    %524 = arith.subf %523, %517 : vector<8x32xf32>
    %525 = math.exp %524 : vector<8x32xf32>
    %526 = arith.addf %522, %525 : vector<8x32xf32>
    %527 = vector.extract_strided_slice %502 {offsets = [16, 0], sizes = [8, 32], strides = [1, 1]} : vector<64x32xf32> to vector<8x32xf32>
    %528 = arith.subf %527, %517 : vector<8x32xf32>
    %529 = math.exp %528 : vector<8x32xf32>
    %530 = arith.addf %526, %529 : vector<8x32xf32>
    %531 = vector.extract_strided_slice %502 {offsets = [24, 0], sizes = [8, 32], strides = [1, 1]} : vector<64x32xf32> to vector<8x32xf32>
    %532 = arith.subf %531, %517 : vector<8x32xf32>
    %533 = math.exp %532 : vector<8x32xf32>
    %534 = arith.addf %530, %533 : vector<8x32xf32>
    %535 = vector.extract_strided_slice %502 {offsets = [32, 0], sizes = [8, 32], strides = [1, 1]} : vector<64x32xf32> to vector<8x32xf32>
    %536 = arith.subf %535, %517 : vector<8x32xf32>
    %537 = math.exp %536 : vector<8x32xf32>
    %538 = arith.addf %534, %537 : vector<8x32xf32>
    %539 = vector.extract_strided_slice %502 {offsets = [40, 0], sizes = [8, 32], strides = [1, 1]} : vector<64x32xf32> to vector<8x32xf32>
    %540 = arith.subf %539, %517 : vector<8x32xf32>
    %541 = math.exp %540 : vector<8x32xf32>
    %542 = arith.addf %538, %541 : vector<8x32xf32>
    %543 = vector.extract_strided_slice %502 {offsets = [48, 0], sizes = [8, 32], strides = [1, 1]} : vector<64x32xf32> to vector<8x32xf32>
    %544 = arith.subf %543, %517 : vector<8x32xf32>
    %545 = math.exp %544 : vector<8x32xf32>
    %546 = arith.addf %542, %545 : vector<8x32xf32>
    %547 = vector.extract_strided_slice %502 {offsets = [56, 0], sizes = [8, 32], strides = [1, 1]} : vector<64x32xf32> to vector<8x32xf32>
    %548 = arith.subf %547, %517 : vector<8x32xf32>
    %549 = math.exp %548 : vector<8x32xf32>
    %550 = arith.addf %546, %549 : vector<8x32xf32>
    %cst_106 = arith.constant 1.000000e+00 : f32
    %551 = vector.broadcast %cst_106 : f32 to vector<8x32xf32>
    %552 = arith.divf %551, %550 : vector<8x32xf32>
    %cst_107 = arith.constant 0.000000e+00 : f32
    %553 = vector.broadcast %cst_107 : f32 to vector<8x64xf32>
    %554 = arith.mulf %521, %552 : vector<8x32xf32>
    %cst_108 = arith.constant dense<0.000000e+00> : vector<8xf32>
    %555 = vector.multi_reduction <add>, %554, %cst_108 [1] : vector<8x32xf32> to vector<8xf32>
    %556 = vector.shape_cast %555 : vector<8xf32> to vector<8x1xf32>
    %cst_109 = arith.constant 3.200000e+01 : f32
    %557 = vector.broadcast %cst_109 : f32 to vector<8x1xf32>
    %558 = arith.divf %556, %557 : vector<8x1xf32>
    %559 = vector.extract_strided_slice %491 {offsets = [0, 0], sizes = [8, 64], strides = [1, 1]} : vector<64x64xf32> to vector<8x64xf32>
    %560 = vector.broadcast %558 : vector<8x1xf32> to vector<8x64xf32>
    %561 = arith.mulf %560, %559 : vector<8x64xf32>
    %562 = arith.addf %553, %561 : vector<8x64xf32>
    %563 = arith.mulf %525, %552 : vector<8x32xf32>
    %cst_110 = arith.constant dense<0.000000e+00> : vector<8xf32>
    %564 = vector.multi_reduction <add>, %563, %cst_110 [1] : vector<8x32xf32> to vector<8xf32>
    %565 = vector.shape_cast %564 : vector<8xf32> to vector<8x1xf32>
    %cst_111 = arith.constant 3.200000e+01 : f32
    %566 = vector.broadcast %cst_111 : f32 to vector<8x1xf32>
    %567 = arith.divf %565, %566 : vector<8x1xf32>
    %568 = vector.extract_strided_slice %491 {offsets = [8, 0], sizes = [8, 64], strides = [1, 1]} : vector<64x64xf32> to vector<8x64xf32>
    %569 = vector.broadcast %567 : vector<8x1xf32> to vector<8x64xf32>
    %570 = arith.mulf %569, %568 : vector<8x64xf32>
    %571 = arith.addf %562, %570 : vector<8x64xf32>
    %572 = arith.mulf %529, %552 : vector<8x32xf32>
    %cst_112 = arith.constant dense<0.000000e+00> : vector<8xf32>
    %573 = vector.multi_reduction <add>, %572, %cst_112 [1] : vector<8x32xf32> to vector<8xf32>
    %574 = vector.shape_cast %573 : vector<8xf32> to vector<8x1xf32>
    %cst_113 = arith.constant 3.200000e+01 : f32
    %575 = vector.broadcast %cst_113 : f32 to vector<8x1xf32>
    %576 = arith.divf %574, %575 : vector<8x1xf32>
    %577 = vector.extract_strided_slice %491 {offsets = [16, 0], sizes = [8, 64], strides = [1, 1]} : vector<64x64xf32> to vector<8x64xf32>
    %578 = vector.broadcast %576 : vector<8x1xf32> to vector<8x64xf32>
    %579 = arith.mulf %578, %577 : vector<8x64xf32>
    %580 = arith.addf %571, %579 : vector<8x64xf32>
    %581 = arith.mulf %533, %552 : vector<8x32xf32>
    %cst_114 = arith.constant dense<0.000000e+00> : vector<8xf32>
    %582 = vector.multi_reduction <add>, %581, %cst_114 [1] : vector<8x32xf32> to vector<8xf32>
    %583 = vector.shape_cast %582 : vector<8xf32> to vector<8x1xf32>
    %cst_115 = arith.constant 3.200000e+01 : f32
    %584 = vector.broadcast %cst_115 : f32 to vector<8x1xf32>
    %585 = arith.divf %583, %584 : vector<8x1xf32>
    %586 = vector.extract_strided_slice %491 {offsets = [24, 0], sizes = [8, 64], strides = [1, 1]} : vector<64x64xf32> to vector<8x64xf32>
    %587 = vector.broadcast %585 : vector<8x1xf32> to vector<8x64xf32>
    %588 = arith.mulf %587, %586 : vector<8x64xf32>
    %589 = arith.addf %580, %588 : vector<8x64xf32>
    %590 = arith.mulf %537, %552 : vector<8x32xf32>
    %cst_116 = arith.constant dense<0.000000e+00> : vector<8xf32>
    %591 = vector.multi_reduction <add>, %590, %cst_116 [1] : vector<8x32xf32> to vector<8xf32>
    %592 = vector.shape_cast %591 : vector<8xf32> to vector<8x1xf32>
    %cst_117 = arith.constant 3.200000e+01 : f32
    %593 = vector.broadcast %cst_117 : f32 to vector<8x1xf32>
    %594 = arith.divf %592, %593 : vector<8x1xf32>
    %595 = vector.extract_strided_slice %491 {offsets = [32, 0], sizes = [8, 64], strides = [1, 1]} : vector<64x64xf32> to vector<8x64xf32>
    %596 = vector.broadcast %594 : vector<8x1xf32> to vector<8x64xf32>
    %597 = arith.mulf %596, %595 : vector<8x64xf32>
    %598 = arith.addf %589, %597 : vector<8x64xf32>
    %599 = arith.mulf %541, %552 : vector<8x32xf32>
    %cst_118 = arith.constant dense<0.000000e+00> : vector<8xf32>
    %600 = vector.multi_reduction <add>, %599, %cst_118 [1] : vector<8x32xf32> to vector<8xf32>
    %601 = vector.shape_cast %600 : vector<8xf32> to vector<8x1xf32>
    %cst_119 = arith.constant 3.200000e+01 : f32
    %602 = vector.broadcast %cst_119 : f32 to vector<8x1xf32>
    %603 = arith.divf %601, %602 : vector<8x1xf32>
    %604 = vector.extract_strided_slice %491 {offsets = [40, 0], sizes = [8, 64], strides = [1, 1]} : vector<64x64xf32> to vector<8x64xf32>
    %605 = vector.broadcast %603 : vector<8x1xf32> to vector<8x64xf32>
    %606 = arith.mulf %605, %604 : vector<8x64xf32>
    %607 = arith.addf %598, %606 : vector<8x64xf32>
    %608 = arith.mulf %545, %552 : vector<8x32xf32>
    %cst_120 = arith.constant dense<0.000000e+00> : vector<8xf32>
    %609 = vector.multi_reduction <add>, %608, %cst_120 [1] : vector<8x32xf32> to vector<8xf32>
    %610 = vector.shape_cast %609 : vector<8xf32> to vector<8x1xf32>
    %cst_121 = arith.constant 3.200000e+01 : f32
    %611 = vector.broadcast %cst_121 : f32 to vector<8x1xf32>
    %612 = arith.divf %610, %611 : vector<8x1xf32>
    %613 = vector.extract_strided_slice %491 {offsets = [48, 0], sizes = [8, 64], strides = [1, 1]} : vector<64x64xf32> to vector<8x64xf32>
    %614 = vector.broadcast %612 : vector<8x1xf32> to vector<8x64xf32>
    %615 = arith.mulf %614, %613 : vector<8x64xf32>
    %616 = arith.addf %607, %615 : vector<8x64xf32>
    %617 = arith.mulf %549, %552 : vector<8x32xf32>
    %cst_122 = arith.constant dense<0.000000e+00> : vector<8xf32>
    %618 = vector.multi_reduction <add>, %617, %cst_122 [1] : vector<8x32xf32> to vector<8xf32>
    %619 = vector.shape_cast %618 : vector<8xf32> to vector<8x1xf32>
    %cst_123 = arith.constant 3.200000e+01 : f32
    %620 = vector.broadcast %cst_123 : f32 to vector<8x1xf32>
    %621 = arith.divf %619, %620 : vector<8x1xf32>
    %622 = vector.extract_strided_slice %491 {offsets = [56, 0], sizes = [8, 64], strides = [1, 1]} : vector<64x64xf32> to vector<8x64xf32>
    %623 = vector.broadcast %621 : vector<8x1xf32> to vector<8x64xf32>
    %624 = arith.mulf %623, %622 : vector<8x64xf32>
    %625 = arith.addf %616, %624 : vector<8x64xf32>
    %c0_124 = arith.constant 0 : index
    %c0_125 = arith.constant 0 : index
    %626 = vector.load %arg8[%c0_124, %c0_125] : memref<8x64xf32, #tpu.memory_space<vmem>>, vector<8x64xf32>
    tpu.vector_store %arg8[%c0_124, %c0_125], %625 {strides = array<i32>} : memref<8x64xf32, #tpu.memory_space<vmem>>, vector<8x64xf32>,
    return
  }
}

</mosaic_0001>

<llo_original>
// kernel: encoder_forward.1
$region0: #{encoder_forward.1}
  #allocation0 [shape = 'u32[]', space=smem, size = 0x4, offset = 0x4, fixed_abs, tag = 'smem constant byte address 0x4 - core index']
  #allocation1 [shape = 'u32[144,128]{1,0:T(1,128)}', space=vmem, size = 0x12000, scoped, tag = 'internal scratch']
  #allocation2 [shape = 'f32[64,32]{1,0:T(8,128)}', space=vmem, size = 0x8000, scoped, tag = 'scratch operand']
  #allocation3 [shape = 'f32[64,32]{1,0:T(8,128)}', space=vmem, size = 0x8000, scoped, tag = 'scratch operand']
  %s0 = inlined_call_operand.vmem [shape: f32[64,32], index: 0, kind: input, shape index: {}]
  %s1 = inlined_call_operand.vmem [shape: f32[32,256], index: 1, kind: input, shape index: {}]
  %s2 = inlined_call_operand.vmem [shape: f32[1,256], index: 2, kind: input, shape index: {}]
  %s3 = inlined_call_operand.vmem [shape: f32[64,256], index: 3, kind: input, shape index: {}]
  %s4 = inlined_call_operand.vmem [shape: f32[64,32], index: 4, kind: input, shape index: {}]
  %s5 = inlined_call_operand.vmem [shape: f32[1,32], index: 5, kind: input, shape index: {}]
  %s6 = inlined_call_operand.vmem [shape: f32[32,32], index: 6, kind: input, shape index: {}]
  %s7 = inlined_call_operand.vmem [shape: f32[1,32], index: 7, kind: input, shape index: {}]
  %s8 = inlined_call_operand.vmem [shape: f32[8,64], index: 8, kind: output, shape index: {}]
  %s9 = sld [smem:[#allocation0]]
  $region42: #{encoder_forward.1} parent=0
    _
  %s11 = ssub.s32 1, %s9
  %s12 = scalar_select 0, %s11, %s9
  // Predicated region
  $region2: #{encoder_forward.1} parent=0 // pred_check
    _
  $region3: #{encoder_forward.1} parent=0 // pred_check_branch
    %14 = sbr.rel (0) target = $region5
  $region4: #{encoder_forward.1} parent=0 // pred_region
    _
  $region5: #{encoder_forward.1} parent=0 // pred_fallthru
    _
  // Predicated region
  $region6: #{encoder_forward.1} parent=0 // pred_check
    _
  $region7: #{encoder_forward.1} parent=0 // pred_check_branch
    %16 = sbr.rel (0) target = $region9
  $region8: #{encoder_forward.1} parent=0 // pred_region
    _
  $region9: #{encoder_forward.1} parent=0 // pred_fallthru
    _
  // Predicated region
  $region10: #{encoder_forward.1} parent=0 // pred_check
    _
  $region11: #{encoder_forward.1} parent=0 // pred_check_branch
    %18 = sbr.rel (0) target = $region13
  $region12: #{encoder_forward.1} parent=0 // pred_region
    _
  $region13: #{encoder_forward.1} parent=0 // pred_fallthru
    _
  // Predicated region
  $region14: #{encoder_forward.1} parent=0 // pred_check
    _
  $region15: #{encoder_forward.1} parent=0 // pred_check_branch
    %20 = sbr.rel (0) target = $region17
  $region16: #{encoder_forward.1} parent=0 // pred_region
    _
  $region17: #{encoder_forward.1} parent=0 // pred_fallthru
    _
  // Predicated region
  $region18: #{encoder_forward.1} parent=0 // pred_check
    _
  $region19: #{encoder_forward.1} parent=0 // pred_check_branch
    %22 = sbr.rel (0) target = $region21
  $region20: #{encoder_forward.1} parent=0 // pred_region
    _
  $region21: #{encoder_forward.1} parent=0 // pred_fallthru
    _
  // Predicated region
  $region22: #{encoder_forward.1} parent=0 // pred_check
    _
  $region23: #{encoder_forward.1} parent=0 // pred_check_branch
    %24 = sbr.rel (0) target = $region25
  $region24: #{encoder_forward.1} parent=0 // pred_region
    _
  $region25: #{encoder_forward.1} parent=0 // pred_fallthru
    _
  // Predicated region
  $region26: #{encoder_forward.1} parent=0 // pred_check
    _
  $region27: #{encoder_forward.1} parent=0 // pred_check_branch
    %26 = sbr.rel (0) target = $region29
  $region28: #{encoder_forward.1} parent=0 // pred_region
    _
  $region29: #{encoder_forward.1} parent=0 // pred_fallthru
    _
  // Predicated region
  $region30: #{encoder_forward.1} parent=0 // pred_check
    _
  $region31: #{encoder_forward.1} parent=0 // pred_check_branch
    %28 = sbr.rel (0) target = $region33
  $region32: #{encoder_forward.1} parent=0 // pred_region
    _
  $region33: #{encoder_forward.1} parent=0 // pred_fallthru
    _
  %v29 = vld [vmem:[%s0] sm:$0xff]
  %v30 = vld [vmem:[%s0 + $0x8] sm:$0xff]
  %v31 = vld [vmem:[%s0 + $0x10] sm:$0xff]
  %v32 = vld [vmem:[%s0 + $0x18] sm:$0xff]
  %v33 = vld [vmem:[%s0 + $0x20] sm:$0xff]
  %v34 = vld [vmem:[%s0 + $0x28] sm:$0xff]
  %v35 = vld [vmem:[%s0 + $0x30] sm:$0xff]
  %v36 = vld [vmem:[%s0 + $0x38] sm:$0xff]
  %v37 = vld [vmem:[%s1] sm:$0xff]
  %v38 = vld [vmem:[%s1 + $0x8] sm:$0xff]
  %v39 = vld [vmem:[%s1 + $0x10] sm:$0xff]
  %v40 = vld [vmem:[%s1 + $0x18] sm:$0xff]
  %v41 = vld [vmem:[%s1 + $0x20] sm:$0xff]
  %v42 = vld [vmem:[%s1 + $0x28] sm:$0xff]
  %v43 = vld [vmem:[%s1 + $0x30] sm:$0xff]
  %v44 = vld [vmem:[%s1 + $0x38] sm:$0xff]
  %v45 = vld [vmem:[%s2] sm:$0x3]
  %v47 = vlaneseq
  %v48 = vshrl.u32 %v47, 7
  %v49 = vsub.s32 0, %v48
  %v50 = vrot.slane %v45, %v49
  %v51 = vlaneseq
  %v52 = vshrl.u32 %v51, 7
  %v53 = vsub.s32 1, %v52
  %v54 = vrot.slane %v45, %v53
  %vm57 = vcmask 261120
  %v59 = vsel %vm57, %v29, 0
  %v62 = vsel %vm57, %v30, 0
  %v65 = vsel %vm57, %v31, 0
  %v68 = vsel %vm57, %v32, 0
  %v71 = vsel %vm57, %v33, 0
  %v74 = vsel %vm57, %v34, 0
  %v77 = vsel %vm57, %v35, 0
  %v80 = vsel %vm57, %v36, 0
  %82 = vmatprep.subr.mxu0 %v38
  %83 = vmatpush1.msra.mxu0 %v37
  %84 = vmatprep.subr.mxu0 %v40
  %85 = vmatpush1.msra.mxu0 %v39
  %86 = vmatprep.subr.mxu0 %v42
  %87 = vmatpush1.msra.mxu0 %v41
  %88 = vmatprep.subr.mxu0 %v44
  %89 = vmatpush1.msra.mxu0 %v43
  %90 = vmatprep.subr.mxu0 0.0
  %91 = vmatpush1.msra.mxu0 0.0
  %92 = vmatprep.subr.mxu0 0.0
  %93 = vmatpush1.msra.mxu0 0.0
  %94 = vmatprep.subr.mxu0 0.0
  %95 = vmatpush1.msra.mxu0 0.0
  %96 = vmatprep.subr.mxu0 0.0
  %97 = vmatpush1.msra.mxu0 0.0
  %98 = vmatprep.subr.mxu0 0.0
  %99 = vmatpush1.msra.mxu0 0.0
  %100 = vmatprep.subr.mxu0 0.0
  %101 = vmatpush1.msra.mxu0 0.0
  %102 = vmatprep.subr.mxu0 0.0
  %103 = vmatpush1.msra.mxu0 0.0
  %104 = vmatprep.subr.mxu0 0.0
  %105 = vmatpush1.msra.mxu0 0.0
  %106 = vmatprep.subr.mxu0 0.0
  %107 = vmatpush1.msra.mxu0 0.0
  %108 = vmatprep.subr.mxu0 0.0
  %109 = vmatpush1.msra.mxu0 0.0
  %110 = vmatprep.subr.mxu0 0.0
  %111 = vmatpush1.msra.mxu0 0.0
  %112 = vmatprep.subr.mxu0 0.0
  %113 = vmatpush1.msra.mxu0 0.0
  %114 = vmatprep.subr.mxu0 0.0
  %115 = vmatpush1.msra.mxu0 0.0
  %116 = vmatprep.subr.mxu0 0.0
  %117 = vmatpush1.msra.mxu0 0.0
  %118 = vmatprep.subr.mxu0 0.0
  %119 = vmatpush1.msra.mxu0 0.0
  %120 = vmatprep.subr.mxu0 0.0
  %121 = vmatpush1.msra.mxu0 0.0
  %122 = vmatprep.subr.mxu0 0.0
  %123 = vmatpush1.msra.mxu0 0.0
  %124 = vmatprep.subr.mxu0 0.0
  %125 = vmatpush1.msra.mxu0 0.0
  %126 = vmatprep.subr.mxu0 0.0
  %127 = vmatpush1.msra.mxu0 0.0
  %128 = vmatprep.subr.mxu0 0.0
  %129 = vmatpush1.msra.mxu0 0.0
  %130 = vmatprep.subr.mxu0 0.0
  %131 = vmatpush1.msra.mxu0 0.0
  %132 = vmatprep.subr.mxu0 0.0
  %133 = vmatpush1.msra.mxu0 0.0
  %134 = vmatprep.subr.mxu0 0.0
  %135 = vmatpush1.msra.mxu0 0.0
  %136 = vmatprep.subr.mxu0 0.0
  %137 = vmatpush1.msra.mxu0 0.0
  %138 = vmatprep.subr.mxu0 0.0
  %139 = vmatpush1.msra.mxu0 0.0
  %140 = vmatprep.subr.mxu0 0.0
  %141 = vmatpush1.msra.mxu0 0.0
  %142 = vmatprep.subr.mxu0 0.0
  %143 = vmatpush1.msra.mxu0 0.0
  %144 = vmatprep.subr.mxu0 0.0
  %145 = vmatpush1.msra.mxu0 0.0
  %146 = vmatprep.mubr.f32.mxu0 0.0
  %147 = vmatmul.mubr.f32.gmra.mrb[0].mxu0 %v59
  %v148 = vpop.f32.mrb[0].mxu0
  %v149 = vadd.f32 %v50, %v148
  %v150 = vpop.f32.mrb[0].mxu0
  %v151 = vadd.f32 %v54, %v150
  %152 = vmatprep.mubr.f32.mxu0 0.0
  %153 = vmatmul.mubr.f32.gmra.mrb[0].mxu0 %v62
  %v154 = vpop.f32.mrb[0].mxu0
  %v155 = vadd.f32 %v50, %v154
  %v156 = vpop.f32.mrb[0].mxu0
  %v157 = vadd.f32 %v54, %v156
  %158 = vmatprep.mubr.f32.mxu0 0.0
  %159 = vmatmul.mubr.f32.gmra.mrb[0].mxu0 %v65
  %v160 = vpop.f32.mrb[0].mxu0
  %v161 = vadd.f32 %v50, %v160
  %v162 = vpop.f32.mrb[0].mxu0
  %v163 = vadd.f32 %v54, %v162
  %164 = vmatprep.mubr.f32.mxu0 0.0
  %165 = vmatmul.mubr.f32.gmra.mrb[0].mxu0 %v68
  %v166 = vpop.f32.mrb[0].mxu0
  %v167 = vadd.f32 %v50, %v166
  %v168 = vpop.f32.mrb[0].mxu0
  %v169 = vadd.f32 %v54, %v168
  %170 = vmatprep.mubr.f32.mxu0 0.0
  %171 = vmatmul.mubr.f32.gmra.mrb[0].mxu0 %v71
  %v172 = vpop.f32.mrb[0].mxu0
  %v173 = vadd.f32 %v50, %v172
  %v174 = vpop.f32.mrb[0].mxu0
  %v175 = vadd.f32 %v54, %v174
  %176 = vmatprep.mubr.f32.mxu0 0.0
  %177 = vmatmul.mubr.f32.gmra.mrb[0].mxu0 %v74
  %v178 = vpop.f32.mrb[0].mxu0
  %v179 = vadd.f32 %v50, %v178
  %v180 = vpop.f32.mrb[0].mxu0
  %v181 = vadd.f32 %v54, %v180
  %182 = vmatprep.mubr.f32.mxu0 0.0
  %183 = vmatmul.mubr.f32.gmra.mrb[0].mxu0 %v77
  %v184 = vpop.f32.mrb[0].mxu0
  %v185 = vadd.f32 %v50, %v184
  %v186 = vpop.f32.mrb[0].mxu0
  %v187 = vadd.f32 %v54, %v186
  %188 = vmatprep.mubr.f32.mxu0 0.0
  %189 = vmatmul.mubr.f32.gmra.mrb[0].mxu0 %v80
  %v190 = vpop.f32.mrb[0].mxu0
  %v191 = vadd.f32 %v50, %v190
  %v192 = vpop.f32.mrb[0].mxu0
  %v193 = vadd.f32 %v54, %v192
  %194 = vdwg.mxu0
  %v195 = vld [vmem:[%s3] sm:$0xff]
  %v196 = vld [vmem:[%s3 + $0x8] sm:$0xff]
  %v197 = vld [vmem:[%s3 + $0x10] sm:$0xff]
  %v198 = vld [vmem:[%s3 + $0x18] sm:$0xff]
  %v199 = vld [vmem:[%s3 + $0x20] sm:$0xff]
  %v200 = vld [vmem:[%s3 + $0x28] sm:$0xff]
  %v201 = vld [vmem:[%s3 + $0x30] sm:$0xff]
  %v202 = vld [vmem:[%s3 + $0x38] sm:$0xff]
  %v203 = vld [vmem:[%s3 + $0x40] sm:$0xff]
  %v204 = vld [vmem:[%s3 + $0x48] sm:$0xff]
  %v205 = vld [vmem:[%s3 + $0x50] sm:$0xff]
  %v206 = vld [vmem:[%s3 + $0x58] sm:$0xff]
  %v207 = vld [vmem:[%s3 + $0x60] sm:$0xff]
  %v208 = vld [vmem:[%s3 + $0x68] sm:$0xff]
  %v209 = vld [vmem:[%s3 + $0x70] sm:$0xff]
  %v210 = vld [vmem:[%s3 + $0x78] sm:$0xff]
  %vm211 = vcmask 523264
  %v213 = vsel %vm211, 0.0, 0
  %215 = vmatprep.subr.mxu0 %v196
  %216 = vmatpush1.msra.mxu0 %v195
  %217 = vmatprep.subr.mxu0 %v198
  %218 = vmatpush1.msra.mxu0 %v197
  %219 = vmatprep.subr.mxu0 %v200
  %220 = vmatpush1.msra.mxu0 %v199
  %221 = vmatprep.subr.mxu0 %v202
  %222 = vmatpush1.msra.mxu0 %v201
  %223 = vmatprep.subr.mxu0 %v204
  %224 = vmatpush1.msra.mxu0 %v203
  %225 = vmatprep.subr.mxu0 %v206
  %226 = vmatpush1.msra.mxu0 %v205
  %227 = vmatprep.subr.mxu0 %v208
  %228 = vmatpush1.msra.mxu0 %v207
  %229 = vmatprep.subr.mxu0 %v210
  %230 = vmatpush1.msra.mxu0 %v209
  %231 = vmatprep.subr.mxu0 0.0
  %232 = vmatpush1.msra.mxu0 0.0
  %233 = vmatprep.subr.mxu0 0.0
  %234 = vmatpush1.msra.mxu0 0.0
  %235 = vmatprep.subr.mxu0 0.0
  %236 = vmatpush1.msra.mxu0 0.0
  %237 = vmatprep.subr.mxu0 0.0
  %238 = vmatpush1.msra.mxu0 0.0
  %239 = vmatprep.subr.mxu0 0.0
  %240 = vmatpush1.msra.mxu0 0.0
  %241 = vmatprep.subr.mxu0 0.0
  %242 = vmatpush1.msra.mxu0 0.0
  %243 = vmatprep.subr.mxu0 0.0
  %244 = vmatpush1.msra.mxu0 0.0
  %245 = vmatprep.subr.mxu0 0.0
  %246 = vmatpush1.msra.mxu0 0.0
  %247 = vmatprep.subr.mxu0 0.0
  %248 = vmatpush1.msra.mxu0 0.0
  %249 = vmatprep.subr.mxu0 0.0
  %250 = vmatpush1.msra.mxu0 0.0
  %251 = vmatprep.subr.mxu0 0.0
  %252 = vmatpush1.msra.mxu0 0.0
  %253 = vmatprep.subr.mxu0 0.0
  %254 = vmatpush1.msra.mxu0 0.0
  %255 = vmatprep.subr.mxu0 0.0
  %256 = vmatpush1.msra.mxu0 0.0
  %257 = vmatprep.subr.mxu0 0.0
  %258 = vmatpush1.msra.mxu0 0.0
  %259 = vmatprep.subr.mxu0 0.0
  %260 = vmatpush1.msra.mxu0 0.0
  %261 = vmatprep.subr.mxu0 0.0
  %262 = vmatpush1.msra.mxu0 0.0
  %263 = vmatprep.subr.mxu0 0.0
  %264 = vmatpush1.msra.mxu0 0.0
  %265 = vmatprep.subr.mxu0 0.0
  %266 = vmatpush1.msra.mxu0 0.0
  %267 = vmatprep.subr.mxu0 0.0
  %268 = vmatpush1.msra.mxu0 0.0
  %269 = vmatprep.subr.mxu0 0.0
  %270 = vmatpush1.msra.mxu0 0.0
  %271 = vmatprep.subr.mxu0 0.0
  %272 = vmatpush1.msra.mxu0 0.0
  %273 = vmatprep.subr.mxu0 0.0
  %274 = vmatpush1.msra.mxu0 0.0
  %275 = vmatprep.subr.mxu0 0.0
  %276 = vmatpush1.msra.mxu0 0.0
  %277 = vmatprep.subr.mxu0 0.0
  %278 = vmatpush1.msra.mxu0 0.0
  %279 = vmatprep.mubr.f32.mxu0 0.0
  %280 = vmatmul.mubr.f32.gmra.mrb[0].mxu0 %v213
  %v281 = vpop.f32.mrb[0].mxu0
  %v282 = vadd.f32 0.0, %v281
  %v283 = vpop.f32.mrb[0].mxu0
  %v284 = vadd.f32 0.0, %v283
  %285 = vdwg.mxu0
  %v286 = vadd.f32 %v282, %v149
  %v287 = vadd.f32 %v284, %v193
  %v288 = vxor.u32 %v286, 2147483648
  %v289 = vmul.f32 %v288, 1.442695
  %v290 = vpow.pop %v289
  %v291 = vadd.f32 %v290, 1.0
  %v292 = vrcp.pop %v291
  %v293 = vmul.f32 1.0, %v292
  %v294 = vtanh.pop %v286
  %v295 = vmul.f32 %v293, 0.0
  %297 = vrot.lane.b32.xlu0 %v294, 64
  %v298 = vpop.permute.xlu0 %297
  %v300 = vmul.f32 %v293, %v298
  %302 = vrot.lane.b32.xlu0 %v300, 32
  %v303 = vpop.permute.xlu0 %302
  %v305 = vadd.f32 %v295, %v303
  %v306 = vtanh.pop %v305
  %308 = vrot.lane.b32.xlu0 %v306, 64
  %v309 = vpop.permute.xlu0 %308
  %v311 = vmul.f32 %v293, %v309
  %v312 = vxor.u32 %v287, 2147483648
  %v313 = vmul.f32 %v312, 1.442695
  %v314 = vpow.pop %v313
  %v315 = vadd.f32 %v314, 1.0
  %v316 = vrcp.pop %v315
  %v317 = vmul.f32 1.0, %v316
  %v318 = vtanh.pop %v287
  %v319 = vmul.f32 %v317, 0.0
  %321 = vrot.lane.b32.xlu0 %v318, 64
  %v322 = vpop.permute.xlu0 %321
  %v324 = vmul.f32 %v317, %v322
  %326 = vrot.lane.b32.xlu0 %v324, 32
  %v327 = vpop.permute.xlu0 %326
  %v329 = vadd.f32 %v319, %v327
  %v330 = vtanh.pop %v329
  %332 = vrot.lane.b32.xlu0 %v330, 64
  %v333 = vpop.permute.xlu0 %332
  %v335 = vmul.f32 %v317, %v333
  %337 = vrot.lane.b32.xlu0 %v311, 32
  %v338 = vpop.permute.xlu0 %337
  %341 = vrot.lane.b32.xlu0 %v335, 64
  %v342 = vpop.permute.xlu0 %341
  %v344 = vsel %vm57, %v338, %v342
  %345 = vst.msk [vmem:[#allocation2] sm:$0xff] %vm57, %v338
  %346 = vrot.lane.b32.xlu0 %v335, 32
  %v347 = vpop.permute.xlu0 %346
  %349 = vst.msk [vmem:[#allocation3 + $0x38] sm:$0xff] %vm57, %v347
  %v351 = vsel %vm211, %v344, 0
  %353 = vmatprep.subr.mxu0 %v196
  %354 = vmatpush1.msra.mxu0 %v195
  %355 = vmatprep.subr.mxu0 %v198
  %356 = vmatpush1.msra.mxu0 %v197
  %357 = vmatprep.subr.mxu0 %v200
  %358 = vmatpush1.msra.mxu0 %v199
  %359 = vmatprep.subr.mxu0 %v202
  %360 = vmatpush1.msra.mxu0 %v201
  %361 = vmatprep.subr.mxu0 %v204
  %362 = vmatpush1.msra.mxu0 %v203
  %363 = vmatprep.subr.mxu0 %v206
  %364 = vmatpush1.msra.mxu0 %v205
  %365 = vmatprep.subr.mxu0 %v208
  %366 = vmatpush1.msra.mxu0 %v207
  %367 = vmatprep.subr.mxu0 %v210
  %368 = vmatpush1.msra.mxu0 %v209
  %369 = vmatprep.subr.mxu0 0.0
  %370 = vmatpush1.msra.mxu0 0.0
  %371 = vmatprep.subr.mxu0 0.0
  %372 = vmatpush1.msra.mxu0 0.0
  %373 = vmatprep.subr.mxu0 0.0
  %374 = vmatpush1.msra.mxu0 0.0
  %375 = vmatprep.subr.mxu0 0.0
  %376 = vmatpush1.msra.mxu0 0.0
  %377 = vmatprep.subr.mxu0 0.0
  %378 = vmatpush1.msra.mxu0 0.0
  %379 = vmatprep.subr.mxu0 0.0
  %380 = vmatpush1.msra.mxu0 0.0
  %381 = vmatprep.subr.mxu0 0.0
  %382 = vmatpush1.msra.mxu0 0.0
  %383 = vmatprep.subr.mxu0 0.0
  %384 = vmatpush1.msra.mxu0 0.0
  %385 = vmatprep.subr.mxu0 0.0
  %386 = vmatpush1.msra.mxu0 0.0
  %387 = vmatprep.subr.mxu0 0.0
  %388 = vmatpush1.msra.mxu0 0.0
  %389 = vmatprep.subr.mxu0 0.0
  %390 = vmatpush1.msra.mxu0 0.0
  %391 = vmatprep.subr.mxu0 0.0
  %392 = vmatpush1.msra.mxu0 0.0
  %393 = vmatprep.subr.mxu0 0.0
  %394 = vmatpush1.msra.mxu0 0.0
  %395 = vmatprep.subr.mxu0 0.0
  %396 = vmatpush1.msra.mxu0 0.0
  %397 = vmatprep.subr.mxu0 0.0
  %398 = vmatpush1.msra.mxu0 0.0
  %399 = vmatprep.subr.mxu0 0.0
  %400 = vmatpush1.msra.mxu0 0.0
  %401 = vmatprep.subr.mxu0 0.0
  %402 = vmatpush1.msra.mxu0 0.0
  %403 = vmatprep.subr.mxu0 0.0
  %404 = vmatpush1.msra.mxu0 0.0
  %405 = vmatprep.subr.mxu0 0.0
  %406 = vmatpush1.msra.mxu0 0.0
  %407 = vmatprep.subr.mxu0 0.0
  %408 = vmatpush1.msra.mxu0 0.0
  %409 = vmatprep.subr.mxu0 0.0
  %410 = vmatpush1.msra.mxu0 0.0
  %411 = vmatprep.subr.mxu0 0.0
  %412 = vmatpush1.msra.mxu0 0.0
  %413 = vmatprep.subr.mxu0 0.0
  %414 = vmatpush1.msra.mxu0 0.0
  %415 = vmatprep.subr.mxu0 0.0
  %416 = vmatpush1.msra.mxu0 0.0
  %417 = vmatprep.mubr.f32.mxu0 0.0
  %418 = vmatmul.mubr.f32.gmra.mrb[0].mxu0 %v351
  %v419 = vpop.f32.mrb[0].mxu0
  %v420 = vadd.f32 0.0, %v419
  %v421 = vpop.f32.mrb[0].mxu0
  %v422 = vadd.f32 0.0, %v421
  %423 = vdwg.mxu0
  %v424 = vadd.f32 %v420, %v155
  %v425 = vadd.f32 %v422, %v187
  %v426 = vxor.u32 %v424, 2147483648
  %v427 = vmul.f32 %v426, 1.442695
  %v428 = vpow.pop %v427
  %v429 = vadd.f32 %v428, 1.0
  %v430 = vrcp.pop %v429
  %v431 = vmul.f32 1.0, %v430
  %v432 = vtanh.pop %v424
  %v433 = vmul.f32 %v431, %v305
  %435 = vrot.lane.b32.xlu0 %v432, 64
  %v436 = vpop.permute.xlu0 %435
  %v438 = vmul.f32 %v431, %v436
  %440 = vrot.lane.b32.xlu0 %v438, 32
  %v441 = vpop.permute.xlu0 %440
  %v443 = vadd.f32 %v433, %v441
  %v444 = vtanh.pop %v443
  %446 = vrot.lane.b32.xlu0 %v444, 64
  %v447 = vpop.permute.xlu0 %446
  %v449 = vmul.f32 %v431, %v447
  %v450 = vxor.u32 %v425, 2147483648
  %v451 = vmul.f32 %v450, 1.442695
  %v452 = vpow.pop %v451
  %v453 = vadd.f32 %v452, 1.0
  %v454 = vrcp.pop %v453
  %v455 = vmul.f32 1.0, %v454
  %v456 = vtanh.pop %v425
  %v457 = vmul.f32 %v455, %v329
  %459 = vrot.lane.b32.xlu0 %v456, 64
  %v460 = vpop.permute.xlu0 %459
  %v462 = vmul.f32 %v455, %v460
  %464 = vrot.lane.b32.xlu0 %v462, 32
  %v465 = vpop.permute.xlu0 %464
  %v467 = vadd.f32 %v457, %v465
  %v468 = vtanh.pop %v467
  %470 = vrot.lane.b32.xlu0 %v468, 64
  %v471 = vpop.permute.xlu0 %470
  %v473 = vmul.f32 %v455, %v471
  %475 = vrot.lane.b32.xlu0 %v449, 32
  %v476 = vpop.permute.xlu0 %475
  %479 = vrot.lane.b32.xlu0 %v473, 64
  %v480 = vpop.permute.xlu0 %479
  %v482 = vsel %vm57, %v476, %v480
  %483 = vst.msk [vmem:[#allocation2 + $0x8] sm:$0xff] %vm57, %v476
  %484 = vrot.lane.b32.xlu0 %v473, 32
  %v485 = vpop.permute.xlu0 %484
  %487 = vst.msk [vmem:[#allocation3 + $0x30] sm:$0xff] %vm57, %v485
  %v489 = vsel %vm211, %v482, 0
  %491 = vmatprep.subr.mxu0 %v196
  %492 = vmatpush1.msra.mxu0 %v195
  %493 = vmatprep.subr.mxu0 %v198
  %494 = vmatpush1.msra.mxu0 %v197
  %495 = vmatprep.subr.mxu0 %v200
  %496 = vmatpush1.msra.mxu0 %v199
  %497 = vmatprep.subr.mxu0 %v202
  %498 = vmatpush1.msra.mxu0 %v201
  %499 = vmatprep.subr.mxu0 %v204
  %500 = vmatpush1.msra.mxu0 %v203
  %501 = vmatprep.subr.mxu0 %v206
  %502 = vmatpush1.msra.mxu0 %v205
  %503 = vmatprep.subr.mxu0 %v208
  %504 = vmatpush1.msra.mxu0 %v207
  %505 = vmatprep.subr.mxu0 %v210
  %506 = vmatpush1.msra.mxu0 %v209
  %507 = vmatprep.subr.mxu0 0.0
  %508 = vmatpush1.msra.mxu0 0.0
  %509 = vmatprep.subr.mxu0 0.0
  %510 = vmatpush1.msra.mxu0 0.0
  %511 = vmatprep.subr.mxu0 0.0
  %512 = vmatpush1.msra.mxu0 0.0
  %513 = vmatprep.subr.mxu0 0.0
  %514 = vmatpush1.msra.mxu0 0.0
  %515 = vmatprep.subr.mxu0 0.0
  %516 = vmatpush1.msra.mxu0 0.0
  %517 = vmatprep.subr.mxu0 0.0
  %518 = vmatpush1.msra.mxu0 0.0
  %519 = vmatprep.subr.mxu0 0.0
  %520 = vmatpush1.msra.mxu0 0.0
  %521 = vmatprep.subr.mxu0 0.0
  %522 = vmatpush1.msra.mxu0 0.0
  %523 = vmatprep.subr.mxu0 0.0
  %524 = vmatpush1.msra.mxu0 0.0
  %525 = vmatprep.subr.mxu0 0.0
  %526 = vmatpush1.msra.mxu0 0.0
  %527 = vmatprep.subr.mxu0 0.0
  %528 = vmatpush1.msra.mxu0 0.0
  %529 = vmatprep.subr.mxu0 0.0
  %530 = vmatpush1.msra.mxu0 0.0
  %531 = vmatprep.subr.mxu0 0.0
  %532 = vmatpush1.msra.mxu0 0.0
  %533 = vmatprep.subr.mxu0 0.0
  %534 = vmatpush1.msra.mxu0 0.0
  %535 = vmatprep.subr.mxu0 0.0
  %536 = vmatpush1.msra.mxu0 0.0
  %537 = vmatprep.subr.mxu0 0.0
  %538 = vmatpush1.msra.mxu0 0.0
  %539 = vmatprep.subr.mxu0 0.0
  %540 = vmatpush1.msra.mxu0 0.0
  %541 = vmatprep.subr.mxu0 0.0
  %542 = vmatpush1.msra.mxu0 0.0
  %543 = vmatprep.subr.mxu0 0.0
  %544 = vmatpush1.msra.mxu0 0.0
  %545 = vmatprep.subr.mxu0 0.0
  %546 = vmatpush1.msra.mxu0 0.0
  %547 = vmatprep.subr.mxu0 0.0
  %548 = vmatpush1.msra.mxu0 0.0
  %549 = vmatprep.subr.mxu0 0.0
  %550 = vmatpush1.msra.mxu0 0.0
  %551 = vmatprep.subr.mxu0 0.0
  %552 = vmatpush1.msra.mxu0 0.0
  %553 = vmatprep.subr.mxu0 0.0
  %554 = vmatpush1.msra.mxu0 0.0
  %555 = vmatprep.mubr.f32.mxu0 0.0
  %556 = vmatmul.mubr.f32.gmra.mrb[0].mxu0 %v489
  %v557 = vpop.f32.mrb[0].mxu0
  %v558 = vadd.f32 0.0, %v557
  %v559 = vpop.f32.mrb[0].mxu0
  %v560 = vadd.f32 0.0, %v559
  %561 = vdwg.mxu0
  %v562 = vadd.f32 %v558, %v161
  %v563 = vadd.f32 %v560, %v181
  %v564 = vxor.u32 %v562, 2147483648
  %v565 = vmul.f32 %v564, 1.442695
  %v566 = vpow.pop %v565
  %v567 = vadd.f32 %v566, 1.0
  %v568 = vrcp.pop %v567
  %v569 = vmul.f32 1.0, %v568
  %v570 = vtanh.pop %v562
  %v571 = vmul.f32 %v569, %v443
  %573 = vrot.lane.b32.xlu0 %v570, 64
  %v574 = vpop.permute.xlu0 %573
  %v576 = vmul.f32 %v569, %v574
  %578 = vrot.lane.b32.xlu0 %v576, 32
  %v579 = vpop.permute.xlu0 %578
  %v581 = vadd.f32 %v571, %v579
  %v582 = vtanh.pop %v581
  %584 = vrot.lane.b32.xlu0 %v582, 64
  %v585 = vpop.permute.xlu0 %584
  %v587 = vmul.f32 %v569, %v585
  %v588 = vxor.u32 %v563, 2147483648
  %v589 = vmul.f32 %v588, 1.442695
  %v590 = vpow.pop %v589
  %v591 = vadd.f32 %v590, 1.0
  %v592 = vrcp.pop %v591
  %v593 = vmul.f32 1.0, %v592
  %v594 = vtanh.pop %v563
  %v595 = vmul.f32 %v593, %v467
  %597 = vrot.lane.b32.xlu0 %v594, 64
  %v598 = vpop.permute.xlu0 %597
  %v600 = vmul.f32 %v593, %v598
  %602 = vrot.lane.b32.xlu0 %v600, 32
  %v603 = vpop.permute.xlu0 %602
  %v605 = vadd.f32 %v595, %v603
  %v606 = vtanh.pop %v605
  %608 = vrot.lane.b32.xlu0 %v606, 64
  %v609 = vpop.permute.xlu0 %608
  %v611 = vmul.f32 %v593, %v609
  %613 = vrot.lane.b32.xlu0 %v587, 32
  %v614 = vpop.permute.xlu0 %613
  %617 = vrot.lane.b32.xlu0 %v611, 64
  %v618 = vpop.permute.xlu0 %617
  %v620 = vsel %vm57, %v614, %v618
  %621 = vst.msk [vmem:[#allocation2 + $0x10] sm:$0xff] %vm57, %v614
  %622 = vrot.lane.b32.xlu0 %v611, 32
  %v623 = vpop.permute.xlu0 %622
  %625 = vst.msk [vmem:[#allocation3 + $0x28] sm:$0xff] %vm57, %v623
  %v627 = vsel %vm211, %v620, 0
  %629 = vmatprep.subr.mxu0 %v196
  %630 = vmatpush1.msra.mxu0 %v195
  %631 = vmatprep.subr.mxu0 %v198
  %632 = vmatpush1.msra.mxu0 %v197
  %633 = vmatprep.subr.mxu0 %v200
  %634 = vmatpush1.msra.mxu0 %v199
  %635 = vmatprep.subr.mxu0 %v202
  %636 = vmatpush1.msra.mxu0 %v201
  %637 = vmatprep.subr.mxu0 %v204
  %638 = vmatpush1.msra.mxu0 %v203
  %639 = vmatprep.subr.mxu0 %v206
  %640 = vmatpush1.msra.mxu0 %v205
  %641 = vmatprep.subr.mxu0 %v208
  %642 = vmatpush1.msra.mxu0 %v207
  %643 = vmatprep.subr.mxu0 %v210
  %644 = vmatpush1.msra.mxu0 %v209
  %645 = vmatprep.subr.mxu0 0.0
  %646 = vmatpush1.msra.mxu0 0.0
  %647 = vmatprep.subr.mxu0 0.0
  %648 = vmatpush1.msra.mxu0 0.0
  %649 = vmatprep.subr.mxu0 0.0
  %650 = vmatpush1.msra.mxu0 0.0
  %651 = vmatprep.subr.mxu0 0.0
  %652 = vmatpush1.msra.mxu0 0.0
  %653 = vmatprep.subr.mxu0 0.0
  %654 = vmatpush1.msra.mxu0 0.0
  %655 = vmatprep.subr.mxu0 0.0
  %656 = vmatpush1.msra.mxu0 0.0
  %657 = vmatprep.subr.mxu0 0.0
  %658 = vmatpush1.msra.mxu0 0.0
  %659 = vmatprep.subr.mxu0 0.0
  %660 = vmatpush1.msra.mxu0 0.0
  %661 = vmatprep.subr.mxu0 0.0
  %662 = vmatpush1.msra.mxu0 0.0
  %663 = vmatprep.subr.mxu0 0.0
  %664 = vmatpush1.msra.mxu0 0.0
  %665 = vmatprep.subr.mxu0 0.0
  %666 = vmatpush1.msra.mxu0 0.0
  %667 = vmatprep.subr.mxu0 0.0
  %668 = vmatpush1.msra.mxu0 0.0
  %669 = vmatprep.subr.mxu0 0.0
  %670 = vmatpush1.msra.mxu0 0.0
  %671 = vmatprep.subr.mxu0 0.0
  %672 = vmatpush1.msra.mxu0 0.0
  %673 = vmatprep.subr.mxu0 0.0
  %674 = vmatpush1.msra.mxu0 0.0
  %675 = vmatprep.subr.mxu0 0.0
  %676 = vmatpush1.msra.mxu0 0.0
  %677 = vmatprep.subr.mxu0 0.0
  %678 = vmatpush1.msra.mxu0 0.0
  %679 = vmatprep.subr.mxu0 0.0
  %680 = vmatpush1.msra.mxu0 0.0
  %681 = vmatprep.subr.mxu0 0.0
  %682 = vmatpush1.msra.mxu0 0.0
  %683 = vmatprep.subr.mxu0 0.0
  %684 = vmatpush1.msra.mxu0 0.0
  %685 = vmatprep.subr.mxu0 0.0
  %686 = vmatpush1.msra.mxu0 0.0
  %687 = vmatprep.subr.mxu0 0.0
  %688 = vmatpush1.msra.mxu0 0.0
  %689 = vmatprep.subr.mxu0 0.0
  %690 = vmatpush1.msra.mxu0 0.0
  %691 = vmatprep.subr.mxu0 0.0
  %692 = vmatpush1.msra.mxu0 0.0
  %693 = vmatprep.mubr.f32.mxu0 0.0
  %694 = vmatmul.mubr.f32.gmra.mrb[0].mxu0 %v627
  %v695 = vpop.f32.mrb[0].mxu0
  %v696 = vadd.f32 0.0, %v695
  %v697 = vpop.f32.mrb[0].mxu0
  %v698 = vadd.f32 0.0, %v697
  %699 = vdwg.mxu0
  %v700 = vadd.f32 %v696, %v167
  %v701 = vadd.f32 %v698, %v175
  %v702 = vxor.u32 %v700, 2147483648
  %v703 = vmul.f32 %v702, 1.442695
  %v704 = vpow.pop %v703
  %v705 = vadd.f32 %v704, 1.0
  %v706 = vrcp.pop %v705
  %v707 = vmul.f32 1.0, %v706
  %v708 = vtanh.pop %v700
  %v709 = vmul.f32 %v707, %v581
  %711 = vrot.lane.b32.xlu0 %v708, 64
  %v712 = vpop.permute.xlu0 %711
  %v714 = vmul.f32 %v707, %v712
  %716 = vrot.lane.b32.xlu0 %v714, 32
  %v717 = vpop.permute.xlu0 %716
  %v719 = vadd.f32 %v709, %v717
  %v720 = vtanh.pop %v719
  %722 = vrot.lane.b32.xlu0 %v720, 64
  %v723 = vpop.permute.xlu0 %722
  %v725 = vmul.f32 %v707, %v723
  %v726 = vxor.u32 %v701, 2147483648
  %v727 = vmul.f32 %v726, 1.442695
  %v728 = vpow.pop %v727
  %v729 = vadd.f32 %v728, 1.0
  %v730 = vrcp.pop %v729
  %v731 = vmul.f32 1.0, %v730
  %v732 = vtanh.pop %v701
  %v733 = vmul.f32 %v731, %v605
  %735 = vrot.lane.b32.xlu0 %v732, 64
  %v736 = vpop.permute.xlu0 %735
  %v738 = vmul.f32 %v731, %v736
  %740 = vrot.lane.b32.xlu0 %v738, 32
  %v741 = vpop.permute.xlu0 %740
  %v743 = vadd.f32 %v733, %v741
  %v744 = vtanh.pop %v743
  %746 = vrot.lane.b32.xlu0 %v744, 64
  %v747 = vpop.permute.xlu0 %746
  %v749 = vmul.f32 %v731, %v747
  %751 = vrot.lane.b32.xlu0 %v725, 32
  %v752 = vpop.permute.xlu0 %751
  %755 = vrot.lane.b32.xlu0 %v749, 64
  %v756 = vpop.permute.xlu0 %755
  %v758 = vsel %vm57, %v752, %v756
  %759 = vst.msk [vmem:[#allocation2 + $0x18] sm:$0xff] %vm57, %v752
  %760 = vrot.lane.b32.xlu0 %v749, 32
  %v761 = vpop.permute.xlu0 %760
  %763 = vst.msk [vmem:[#allocation3 + $0x20] sm:$0xff] %vm57, %v761
  %v765 = vsel %vm211, %v758, 0
  %767 = vmatprep.subr.mxu0 %v196
  %768 = vmatpush1.msra.mxu0 %v195
  %769 = vmatprep.subr.mxu0 %v198
  %770 = vmatpush1.msra.mxu0 %v197
  %771 = vmatprep.subr.mxu0 %v200
  %772 = vmatpush1.msra.mxu0 %v199
  %773 = vmatprep.subr.mxu0 %v202
  %774 = vmatpush1.msra.mxu0 %v201
  %775 = vmatprep.subr.mxu0 %v204
  %776 = vmatpush1.msra.mxu0 %v203
  %777 = vmatprep.subr.mxu0 %v206
  %778 = vmatpush1.msra.mxu0 %v205
  %779 = vmatprep.subr.mxu0 %v208
  %780 = vmatpush1.msra.mxu0 %v207
  %781 = vmatprep.subr.mxu0 %v210
  %782 = vmatpush1.msra.mxu0 %v209
  %783 = vmatprep.subr.mxu0 0.0
  %784 = vmatpush1.msra.mxu0 0.0
  %785 = vmatprep.subr.mxu0 0.0
  %786 = vmatpush1.msra.mxu0 0.0
  %787 = vmatprep.subr.mxu0 0.0
  %788 = vmatpush1.msra.mxu0 0.0
  %789 = vmatprep.subr.mxu0 0.0
  %790 = vmatpush1.msra.mxu0 0.0
  %791 = vmatprep.subr.mxu0 0.0
  %792 = vmatpush1.msra.mxu0 0.0
  %793 = vmatprep.subr.mxu0 0.0
  %794 = vmatpush1.msra.mxu0 0.0
  %795 = vmatprep.subr.mxu0 0.0
  %796 = vmatpush1.msra.mxu0 0.0
  %797 = vmatprep.subr.mxu0 0.0
  %798 = vmatpush1.msra.mxu0 0.0
  %799 = vmatprep.subr.mxu0 0.0
  %800 = vmatpush1.msra.mxu0 0.0
  %801 = vmatprep.subr.mxu0 0.0
  %802 = vmatpush1.msra.mxu0 0.0
  %803 = vmatprep.subr.mxu0 0.0
  %804 = vmatpush1.msra.mxu0 0.0
  %805 = vmatprep.subr.mxu0 0.0
  %806 = vmatpush1.msra.mxu0 0.0
  %807 = vmatprep.subr.mxu0 0.0
  %808 = vmatpush1.msra.mxu0 0.0
  %809 = vmatprep.subr.mxu0 0.0
  %810 = vmatpush1.msra.mxu0 0.0
  %811 = vmatprep.subr.mxu0 0.0
  %812 = vmatpush1.msra.mxu0 0.0
  %813 = vmatprep.subr.mxu0 0.0
  %814 = vmatpush1.msra.mxu0 0.0
  %815 = vmatprep.subr.mxu0 0.0
  %816 = vmatpush1.msra.mxu0 0.0
  %817 = vmatprep.subr.mxu0 0.0
  %818 = vmatpush1.msra.mxu0 0.0
  %819 = vmatprep.subr.mxu0 0.0
  %820 = vmatpush1.msra.mxu0 0.0
  %821 = vmatprep.subr.mxu0 0.0
  %822 = vmatpush1.msra.mxu0 0.0
  %823 = vmatprep.subr.mxu0 0.0
  %824 = vmatpush1.msra.mxu0 0.0
  %825 = vmatprep.subr.mxu0 0.0
  %826 = vmatpush1.msra.mxu0 0.0
  %827 = vmatprep.subr.mxu0 0.0
  %828 = vmatpush1.msra.mxu0 0.0
  %829 = vmatprep.subr.mxu0 0.0
  %830 = vmatpush1.msra.mxu0 0.0
  %831 = vmatprep.mubr.f32.mxu0 0.0
  %832 = vmatmul.mubr.f32.gmra.mrb[0].mxu0 %v765
  %v833 = vpop.f32.mrb[0].mxu0
  %v834 = vadd.f32 0.0, %v833
  %v835 = vpop.f32.mrb[0].mxu0
  %v836 = vadd.f32 0.0, %v835
  %837 = vdwg.mxu0
  %v838 = vadd.f32 %v834, %v173
  %v839 = vadd.f32 %v836, %v169
  %v840 = vxor.u32 %v838, 2147483648
  %v841 = vmul.f32 %v840, 1.442695
  %v842 = vpow.pop %v841
  %v843 = vadd.f32 %v842, 1.0
  %v844 = vrcp.pop %v843
  %v845 = vmul.f32 1.0, %v844
  %v846 = vtanh.pop %v838
  %v847 = vmul.f32 %v845, %v719
  %849 = vrot.lane.b32.xlu0 %v846, 64
  %v850 = vpop.permute.xlu0 %849
  %v852 = vmul.f32 %v845, %v850
  %854 = vrot.lane.b32.xlu0 %v852, 32
  %v855 = vpop.permute.xlu0 %854
  %v857 = vadd.f32 %v847, %v855
  %v858 = vtanh.pop %v857
  %860 = vrot.lane.b32.xlu0 %v858, 64
  %v861 = vpop.permute.xlu0 %860
  %v863 = vmul.f32 %v845, %v861
  %v864 = vxor.u32 %v839, 2147483648
  %v865 = vmul.f32 %v864, 1.442695
  %v866 = vpow.pop %v865
  %v867 = vadd.f32 %v866, 1.0
  %v868 = vrcp.pop %v867
  %v869 = vmul.f32 1.0, %v868
  %v870 = vtanh.pop %v839
  %v871 = vmul.f32 %v869, %v743
  %873 = vrot.lane.b32.xlu0 %v870, 64
  %v874 = vpop.permute.xlu0 %873
  %v876 = vmul.f32 %v869, %v874
  %878 = vrot.lane.b32.xlu0 %v876, 32
  %v879 = vpop.permute.xlu0 %878
  %v881 = vadd.f32 %v871, %v879
  %v882 = vtanh.pop %v881
  %884 = vrot.lane.b32.xlu0 %v882, 64
  %v885 = vpop.permute.xlu0 %884
  %v887 = vmul.f32 %v869, %v885
  %889 = vrot.lane.b32.xlu0 %v863, 32
  %v890 = vpop.permute.xlu0 %889
  %893 = vrot.lane.b32.xlu0 %v887, 64
  %v894 = vpop.permute.xlu0 %893
  %v896 = vsel %vm57, %v890, %v894
  %897 = vst.msk [vmem:[#allocation2 + $0x20] sm:$0xff] %vm57, %v890
  %898 = vrot.lane.b32.xlu0 %v887, 32
  %v899 = vpop.permute.xlu0 %898
  %901 = vst.msk [vmem:[#allocation3 + $0x18] sm:$0xff] %vm57, %v899
  %v903 = vsel %vm211, %v896, 0
  %905 = vmatprep.subr.mxu0 %v196
  %906 = vmatpush1.msra.mxu0 %v195
  %907 = vmatprep.subr.mxu0 %v198
  %908 = vmatpush1.msra.mxu0 %v197
  %909 = vmatprep.subr.mxu0 %v200
  %910 = vmatpush1.msra.mxu0 %v199
  %911 = vmatprep.subr.mxu0 %v202
  %912 = vmatpush1.msra.mxu0 %v201
  %913 = vmatprep.subr.mxu0 %v204
  %914 = vmatpush1.msra.mxu0 %v203
  %915 = vmatprep.subr.mxu0 %v206
  %916 = vmatpush1.msra.mxu0 %v205
  %917 = vmatprep.subr.mxu0 %v208
  %918 = vmatpush1.msra.mxu0 %v207
  %919 = vmatprep.subr.mxu0 %v210
  %920 = vmatpush1.msra.mxu0 %v209
  %921 = vmatprep.subr.mxu0 0.0
  %922 = vmatpush1.msra.mxu0 0.0
  %923 = vmatprep.subr.mxu0 0.0
  %924 = vmatpush1.msra.mxu0 0.0
  %925 = vmatprep.subr.mxu0 0.0
  %926 = vmatpush1.msra.mxu0 0.0
  %927 = vmatprep.subr.mxu0 0.0
  %928 = vmatpush1.msra.mxu0 0.0
  %929 = vmatprep.subr.mxu0 0.0
  %930 = vmatpush1.msra.mxu0 0.0
  %931 = vmatprep.subr.mxu0 0.0
  %932 = vmatpush1.msra.mxu0 0.0
  %933 = vmatprep.subr.mxu0 0.0
  %934 = vmatpush1.msra.mxu0 0.0
  %935 = vmatprep.subr.mxu0 0.0
  %936 = vmatpush1.msra.mxu0 0.0
  %937 = vmatprep.subr.mxu0 0.0
  %938 = vmatpush1.msra.mxu0 0.0
  %939 = vmatprep.subr.mxu0 0.0
  %940 = vmatpush1.msra.mxu0 0.0
  %941 = vmatprep.subr.mxu0 0.0
  %942 = vmatpush1.msra.mxu0 0.0
  %943 = vmatprep.subr.mxu0 0.0
  %944 = vmatpush1.msra.mxu0 0.0
  %945 = vmatprep.subr.mxu0 0.0
  %946 = vmatpush1.msra.mxu0 0.0
  %947 = vmatprep.subr.mxu0 0.0
  %948 = vmatpush1.msra.mxu0 0.0
  %949 = vmatprep.subr.mxu0 0.0
  %950 = vmatpush1.msra.mxu0 0.0
  %951 = vmatprep.subr.mxu0 0.0
  %952 = vmatpush1.msra.mxu0 0.0
  %953 = vmatprep.subr.mxu0 0.0
  %954 = vmatpush1.msra.mxu0 0.0
  %955 = vmatprep.subr.mxu0 0.0
  %956 = vmatpush1.msra.mxu0 0.0
  %957 = vmatprep.subr.mxu0 0.0
  %958 = vmatpush1.msra.mxu0 0.0
  %959 = vmatprep.subr.mxu0 0.0
  %960 = vmatpush1.msra.mxu0 0.0
  %961 = vmatprep.subr.mxu0 0.0
  %962 = vmatpush1.msra.mxu0 0.0
  %963 = vmatprep.subr.mxu0 0.0
  %964 = vmatpush1.msra.mxu0 0.0
  %965 = vmatprep.subr.mxu0 0.0
  %966 = vmatpush1.msra.mxu0 0.0
  %967 = vmatprep.subr.mxu0 0.0
  %968 = vmatpush1.msra.mxu0 0.0
  %969 = vmatprep.mubr.f32.mxu0 0.0
  %970 = vmatmul.mubr.f32.gmra.mrb[0].mxu0 %v903
  %v971 = vpop.f32.mrb[0].mxu0
  %v972 = vadd.f32 0.0, %v971
  %v973 = vpop.f32.mrb[0].mxu0
  %v974 = vadd.f32 0.0, %v973
  %975 = vdwg.mxu0
  %v976 = vadd.f32 %v972, %v179
  %v977 = vadd.f32 %v974, %v163
  %v978 = vxor.u32 %v976, 2147483648
  %v979 = vmul.f32 %v978, 1.442695
  %v980 = vpow.pop %v979
  %v981 = vadd.f32 %v980, 1.0
  %v982 = vrcp.pop %v981
  %v983 = vmul.f32 1.0, %v982
  %v984 = vtanh.pop %v976
  %v985 = vmul.f32 %v983, %v857
  %987 = vrot.lane.b32.xlu0 %v984, 64
  %v988 = vpop.permute.xlu0 %987
  %v990 = vmul.f32 %v983, %v988
  %992 = vrot.lane.b32.xlu0 %v990, 32
  %v993 = vpop.permute.xlu0 %992
  %v995 = vadd.f32 %v985, %v993
  %v996 = vtanh.pop %v995
  %998 = vrot.lane.b32.xlu0 %v996, 64
  %v999 = vpop.permute.xlu0 %998
  %v1001 = vmul.f32 %v983, %v999
  %v1002 = vxor.u32 %v977, 2147483648
  %v1003 = vmul.f32 %v1002, 1.442695
  %v1004 = vpow.pop %v1003
  %v1005 = vadd.f32 %v1004, 1.0
  %v1006 = vrcp.pop %v1005
  %v1007 = vmul.f32 1.0, %v1006
  %v1008 = vtanh.pop %v977
  %v1009 = vmul.f32 %v1007, %v881
  %1011 = vrot.lane.b32.xlu0 %v1008, 64
  %v1012 = vpop.permute.xlu0 %1011
  %v1014 = vmul.f32 %v1007, %v1012
  %1016 = vrot.lane.b32.xlu0 %v1014, 32
  %v1017 = vpop.permute.xlu0 %1016
  %v1019 = vadd.f32 %v1009, %v1017
  %v1020 = vtanh.pop %v1019
  %1022 = vrot.lane.b32.xlu0 %v1020, 64
  %v1023 = vpop.permute.xlu0 %1022
  %v1025 = vmul.f32 %v1007, %v1023
  %1027 = vrot.lane.b32.xlu0 %v1001, 32
  %v1028 = vpop.permute.xlu0 %1027
  %1031 = vrot.lane.b32.xlu0 %v1025, 64
  %v1032 = vpop.permute.xlu0 %1031
  %v1034 = vsel %vm57, %v1028, %v1032
  %1035 = vst.msk [vmem:[#allocation2 + $0x28] sm:$0xff] %vm57, %v1028
  %1036 = vrot.lane.b32.xlu0 %v1025, 32
  %v1037 = vpop.permute.xlu0 %1036
  %1039 = vst.msk [vmem:[#allocation3 + $0x10] sm:$0xff] %vm57, %v1037
  %v1041 = vsel %vm211, %v1034, 0
  %1043 = vmatprep.subr.mxu0 %v196
  %1044 = vmatpush1.msra.mxu0 %v195
  %1045 = vmatprep.subr.mxu0 %v198
  %1046 = vmatpush1.msra.mxu0 %v197
  %1047 = vmatprep.subr.mxu0 %v200
  %1048 = vmatpush1.msra.mxu0 %v199
  %1049 = vmatprep.subr.mxu0 %v202
  %1050 = vmatpush1.msra.mxu0 %v201
  %1051 = vmatprep.subr.mxu0 %v204
  %1052 = vmatpush1.msra.mxu0 %v203
  %1053 = vmatprep.subr.mxu0 %v206
  %1054 = vmatpush1.msra.mxu0 %v205
  %1055 = vmatprep.subr.mxu0 %v208
  %1056 = vmatpush1.msra.mxu0 %v207
  %1057 = vmatprep.subr.mxu0 %v210
  %1058 = vmatpush1.msra.mxu0 %v209
  %1059 = vmatprep.subr.mxu0 0.0
  %1060 = vmatpush1.msra.mxu0 0.0
  %1061 = vmatprep.subr.mxu0 0.0
  %1062 = vmatpush1.msra.mxu0 0.0
  %1063 = vmatprep.subr.mxu0 0.0
  %1064 = vmatpush1.msra.mxu0 0.0
  %1065 = vmatprep.subr.mxu0 0.0
  %1066 = vmatpush1.msra.mxu0 0.0
  %1067 = vmatprep.subr.mxu0 0.0
  %1068 = vmatpush1.msra.mxu0 0.0
  %1069 = vmatprep.subr.mxu0 0.0
  %1070 = vmatpush1.msra.mxu0 0.0
  %1071 = vmatprep.subr.mxu0 0.0
  %1072 = vmatpush1.msra.mxu0 0.0
  %1073 = vmatprep.subr.mxu0 0.0
  %1074 = vmatpush1.msra.mxu0 0.0
  %1075 = vmatprep.subr.mxu0 0.0
  %1076 = vmatpush1.msra.mxu0 0.0
  %1077 = vmatprep.subr.mxu0 0.0
  %1078 = vmatpush1.msra.mxu0 0.0
  %1079 = vmatprep.subr.mxu0 0.0
  %1080 = vmatpush1.msra.mxu0 0.0
  %1081 = vmatprep.subr.mxu0 0.0
  %1082 = vmatpush1.msra.mxu0 0.0
  %1083 = vmatprep.subr.mxu0 0.0
  %1084 = vmatpush1.msra.mxu0 0.0
  %1085 = vmatprep.subr.mxu0 0.0
  %1086 = vmatpush1.msra.mxu0 0.0
  %1087 = vmatprep.subr.mxu0 0.0
  %1088 = vmatpush1.msra.mxu0 0.0
  %1089 = vmatprep.subr.mxu0 0.0
  %1090 = vmatpush1.msra.mxu0 0.0
  %1091 = vmatprep.subr.mxu0 0.0
  %1092 = vmatpush1.msra.mxu0 0.0
  %1093 = vmatprep.subr.mxu0 0.0
  %1094 = vmatpush1.msra.mxu0 0.0
  %1095 = vmatprep.subr.mxu0 0.0
  %1096 = vmatpush1.msra.mxu0 0.0
  %1097 = vmatprep.subr.mxu0 0.0
  %1098 = vmatpush1.msra.mxu0 0.0
  %1099 = vmatprep.subr.mxu0 0.0
  %1100 = vmatpush1.msra.mxu0 0.0
  %1101 = vmatprep.subr.mxu0 0.0
  %1102 = vmatpush1.msra.mxu0 0.0
  %1103 = vmatprep.subr.mxu0 0.0
  %1104 = vmatpush1.msra.mxu0 0.0
  %1105 = vmatprep.subr.mxu0 0.0
  %1106 = vmatpush1.msra.mxu0 0.0
  %1107 = vmatprep.mubr.f32.mxu0 0.0
  %1108 = vmatmul.mubr.f32.gmra.mrb[0].mxu0 %v1041
  %v1109 = vpop.f32.mrb[0].mxu0
  %v1110 = vadd.f32 0.0, %v1109
  %v1111 = vpop.f32.mrb[0].mxu0
  %v1112 = vadd.f32 0.0, %v1111
  %1113 = vdwg.mxu0
  %v1114 = vadd.f32 %v1110, %v185
  %v1115 = vadd.f32 %v1112, %v157
  %v1116 = vxor.u32 %v1114, 2147483648
  %v1117 = vmul.f32 %v1116, 1.442695
  %v1118 = vpow.pop %v1117
  %v1119 = vadd.f32 %v1118, 1.0
  %v1120 = vrcp.pop %v1119
  %v1121 = vmul.f32 1.0, %v1120
  %v1122 = vtanh.pop %v1114
  %v1123 = vmul.f32 %v1121, %v995
  %1125 = vrot.lane.b32.xlu0 %v1122, 64
  %v1126 = vpop.permute.xlu0 %1125
  %v1128 = vmul.f32 %v1121, %v1126
  %1130 = vrot.lane.b32.xlu0 %v1128, 32
  %v1131 = vpop.permute.xlu0 %1130
  %v1133 = vadd.f32 %v1123, %v1131
  %v1134 = vtanh.pop %v1133
  %1136 = vrot.lane.b32.xlu0 %v1134, 64
  %v1137 = vpop.permute.xlu0 %1136
  %v1139 = vmul.f32 %v1121, %v1137
  %v1140 = vxor.u32 %v1115, 2147483648
  %v1141 = vmul.f32 %v1140, 1.442695
  %v1142 = vpow.pop %v1141
  %v1143 = vadd.f32 %v1142, 1.0
  %v1144 = vrcp.pop %v1143
  %v1145 = vmul.f32 1.0, %v1144
  %v1146 = vtanh.pop %v1115
  %v1147 = vmul.f32 %v1145, %v1019
  %1149 = vrot.lane.b32.xlu0 %v1146, 64
  %v1150 = vpop.permute.xlu0 %1149
  %v1152 = vmul.f32 %v1145, %v1150
  %1154 = vrot.lane.b32.xlu0 %v1152, 32
  %v1155 = vpop.permute.xlu0 %1154
  %v1157 = vadd.f32 %v1147, %v1155
  %v1158 = vtanh.pop %v1157
  %1160 = vrot.lane.b32.xlu0 %v1158, 64
  %v1161 = vpop.permute.xlu0 %1160
  %v1163 = vmul.f32 %v1145, %v1161
  %1165 = vrot.lane.b32.xlu0 %v1139, 32
  %v1166 = vpop.permute.xlu0 %1165
  %1169 = vrot.lane.b32.xlu0 %v1163, 64
  %v1170 = vpop.permute.xlu0 %1169
  %v1172 = vsel %vm57, %v1166, %v1170
  %1173 = vst.msk [vmem:[#allocation2 + $0x30] sm:$0xff] %vm57, %v1166
  %1174 = vrot.lane.b32.xlu0 %v1163, 32
  %v1175 = vpop.permute.xlu0 %1174
  %1177 = vst.msk [vmem:[#allocation3 + $0x8] sm:$0xff] %vm57, %v1175
  %v1179 = vsel %vm211, %v1172, 0
  %1181 = vmatprep.subr.mxu0 %v196
  %1182 = vmatpush1.msra.mxu0 %v195
  %1183 = vmatprep.subr.mxu0 %v198
  %1184 = vmatpush1.msra.mxu0 %v197
  %1185 = vmatprep.subr.mxu0 %v200
  %1186 = vmatpush1.msra.mxu0 %v199
  %1187 = vmatprep.subr.mxu0 %v202
  %1188 = vmatpush1.msra.mxu0 %v201
  %1189 = vmatprep.subr.mxu0 %v204
  %1190 = vmatpush1.msra.mxu0 %v203
  %1191 = vmatprep.subr.mxu0 %v206
  %1192 = vmatpush1.msra.mxu0 %v205
  %1193 = vmatprep.subr.mxu0 %v208
  %1194 = vmatpush1.msra.mxu0 %v207
  %1195 = vmatprep.subr.mxu0 %v210
  %1196 = vmatpush1.msra.mxu0 %v209
  %1197 = vmatprep.subr.mxu0 0.0
  %1198 = vmatpush1.msra.mxu0 0.0
  %1199 = vmatprep.subr.mxu0 0.0
  %1200 = vmatpush1.msra.mxu0 0.0
  %1201 = vmatprep.subr.mxu0 0.0
  %1202 = vmatpush1.msra.mxu0 0.0
  %1203 = vmatprep.subr.mxu0 0.0
  %1204 = vmatpush1.msra.mxu0 0.0
  %1205 = vmatprep.subr.mxu0 0.0
  %1206 = vmatpush1.msra.mxu0 0.0
  %1207 = vmatprep.subr.mxu0 0.0
  %1208 = vmatpush1.msra.mxu0 0.0
  %1209 = vmatprep.subr.mxu0 0.0
  %1210 = vmatpush1.msra.mxu0 0.0
  %1211 = vmatprep.subr.mxu0 0.0
  %1212 = vmatpush1.msra.mxu0 0.0
  %1213 = vmatprep.subr.mxu0 0.0
  %1214 = vmatpush1.msra.mxu0 0.0
  %1215 = vmatprep.subr.mxu0 0.0
  %1216 = vmatpush1.msra.mxu0 0.0
  %1217 = vmatprep.subr.mxu0 0.0
  %1218 = vmatpush1.msra.mxu0 0.0
  %1219 = vmatprep.subr.mxu0 0.0
  %1220 = vmatpush1.msra.mxu0 0.0
  %1221 = vmatprep.subr.mxu0 0.0
  %1222 = vmatpush1.msra.mxu0 0.0
  %1223 = vmatprep.subr.mxu0 0.0
  %1224 = vmatpush1.msra.mxu0 0.0
  %1225 = vmatprep.subr.mxu0 0.0
  %1226 = vmatpush1.msra.mxu0 0.0
  %1227 = vmatprep.subr.mxu0 0.0
  %1228 = vmatpush1.msra.mxu0 0.0
  %1229 = vmatprep.subr.mxu0 0.0
  %1230 = vmatpush1.msra.mxu0 0.0
  %1231 = vmatprep.subr.mxu0 0.0
  %1232 = vmatpush1.msra.mxu0 0.0
  %1233 = vmatprep.subr.mxu0 0.0
  %1234 = vmatpush1.msra.mxu0 0.0
  %1235 = vmatprep.subr.mxu0 0.0
  %1236 = vmatpush1.msra.mxu0 0.0
  %1237 = vmatprep.subr.mxu0 0.0
  %1238 = vmatpush1.msra.mxu0 0.0
  %1239 = vmatprep.subr.mxu0 0.0
  %1240 = vmatpush1.msra.mxu0 0.0
  %1241 = vmatprep.subr.mxu0 0.0
  %1242 = vmatpush1.msra.mxu0 0.0
  %1243 = vmatprep.subr.mxu0 0.0
  %1244 = vmatpush1.msra.mxu0 0.0
  %1245 = vmatprep.mubr.f32.mxu0 0.0
  %1246 = vmatmul.mubr.f32.gmra.mrb[0].mxu0 %v1179
  %v1247 = vpop.f32.mrb[0].mxu0
  %v1248 = vadd.f32 0.0, %v1247
  %v1249 = vpop.f32.mrb[0].mxu0
  %v1250 = vadd.f32 0.0, %v1249
  %1251 = vdwg.mxu0
  %v1252 = vadd.f32 %v1248, %v191
  %v1253 = vadd.f32 %v1250, %v151
  %v1254 = vxor.u32 %v1252, 2147483648
  %v1255 = vmul.f32 %v1254, 1.442695
  %v1256 = vpow.pop %v1255
  %v1257 = vadd.f32 %v1256, 1.0
  %v1258 = vrcp.pop %v1257
  %v1259 = vmul.f32 1.0, %v1258
  %v1260 = vtanh.pop %v1252
  %v1261 = vmul.f32 %v1259, %v1133
  %1263 = vrot.lane.b32.xlu0 %v1260, 64
  %v1264 = vpop.permute.xlu0 %1263
  %v1266 = vmul.f32 %v1259, %v1264
  %1268 = vrot.lane.b32.xlu0 %v1266, 32
  %v1269 = vpop.permute.xlu0 %1268
  %v1271 = vadd.f32 %v1261, %v1269
  %v1272 = vtanh.pop %v1271
  %1274 = vrot.lane.b32.xlu0 %v1272, 64
  %v1275 = vpop.permute.xlu0 %1274
  %v1277 = vmul.f32 %v1259, %v1275
  %v1278 = vxor.u32 %v1253, 2147483648
  %v1279 = vmul.f32 %v1278, 1.442695
  %v1280 = vpow.pop %v1279
  %v1281 = vadd.f32 %v1280, 1.0
  %v1282 = vrcp.pop %v1281
  %v1283 = vmul.f32 1.0, %v1282
  %v1284 = vtanh.pop %v1253
  %v1285 = vmul.f32 %v1283, %v1157
  %1287 = vrot.lane.b32.xlu0 %v1284, 64
  %v1288 = vpop.permute.xlu0 %1287
  %v1290 = vmul.f32 %v1283, %v1288
  %1292 = vrot.lane.b32.xlu0 %v1290, 32
  %v1293 = vpop.permute.xlu0 %1292
  %v1295 = vadd.f32 %v1285, %v1293
  %v1296 = vtanh.pop %v1295
  %1298 = vrot.lane.b32.xlu0 %v1296, 64
  %v1299 = vpop.permute.xlu0 %1298
  %v1301 = vmul.f32 %v1283, %v1299
  %1303 = vrot.lane.b32.xlu0 %v1277, 32
  %v1304 = vpop.permute.xlu0 %1303
  %1306 = vst.msk [vmem:[#allocation2 + $0x38] sm:$0xff] %vm57, %v1304
  %1308 = vrot.lane.b32.xlu0 %v1301, 32
  %v1309 = vpop.permute.xlu0 %1308
  %1311 = vst.msk [vmem:[#allocation3] sm:$0xff] %vm57, %v1309
  %v1312 = vld [vmem:[#allocation2] sm:$0xff]
  %v1313 = vld [vmem:[#allocation2 + $0x8] sm:$0xff]
  %v1314 = vld [vmem:[#allocation2 + $0x10] sm:$0xff]
  %v1315 = vld [vmem:[#allocation2 + $0x18] sm:$0xff]
  %v1316 = vld [vmem:[#allocation2 + $0x20] sm:$0xff]
  %v1317 = vld [vmem:[#allocation2 + $0x28] sm:$0xff]
  %v1318 = vld [vmem:[#allocation2 + $0x30] sm:$0xff]
  %v1319 = vld [vmem:[#allocation2 + $0x38] sm:$0xff]
  %v1320 = vld [vmem:[#allocation3] sm:$0xff]
  %v1321 = vld [vmem:[#allocation3 + $0x8] sm:$0xff]
  %v1322 = vld [vmem:[#allocation3 + $0x10] sm:$0xff]
  %v1323 = vld [vmem:[#allocation3 + $0x18] sm:$0xff]
  %v1324 = vld [vmem:[#allocation3 + $0x20] sm:$0xff]
  %v1325 = vld [vmem:[#allocation3 + $0x28] sm:$0xff]
  %v1326 = vld [vmem:[#allocation3 + $0x30] sm:$0xff]
  %v1327 = vld [vmem:[#allocation3 + $0x38] sm:$0xff]
  %1336 = vrot.lane.b32.xlu0 %v1320, 32
  %v1337 = vpop.permute.xlu0 %1336
  %1338 = vrot.lane.b32.xlu0 %v1321, 32
  %v1339 = vpop.permute.xlu0 %1338
  %1340 = vrot.lane.b32.xlu0 %v1322, 32
  %v1341 = vpop.permute.xlu0 %1340
  %1342 = vrot.lane.b32.xlu0 %v1323, 32
  %v1343 = vpop.permute.xlu0 %1342
  %1344 = vrot.lane.b32.xlu0 %v1324, 32
  %v1345 = vpop.permute.xlu0 %1344
  %1346 = vrot.lane.b32.xlu0 %v1325, 32
  %v1347 = vpop.permute.xlu0 %1346
  %1348 = vrot.lane.b32.xlu0 %v1326, 32
  %v1349 = vpop.permute.xlu0 %1348
  %1350 = vrot.lane.b32.xlu0 %v1327, 32
  %v1351 = vpop.permute.xlu0 %1350
  %v1360 = vsel %vm57, %v1312, %v1337
  %v1361 = vsel %vm57, %v1313, %v1339
  %v1362 = vsel %vm57, %v1314, %v1341
  %v1363 = vsel %vm57, %v1315, %v1343
  %v1364 = vsel %vm57, %v1316, %v1345
  %v1365 = vsel %vm57, %v1317, %v1347
  %v1366 = vsel %vm57, %v1318, %v1349
  %v1367 = vsel %vm57, %v1319, %v1351
  %v1368 = vld [vmem:[%s4] sm:$0xff]
  %v1369 = vld [vmem:[%s4 + $0x8] sm:$0xff]
  %v1370 = vld [vmem:[%s4 + $0x10] sm:$0xff]
  %v1371 = vld [vmem:[%s4 + $0x18] sm:$0xff]
  %v1372 = vld [vmem:[%s4 + $0x20] sm:$0xff]
  %v1373 = vld [vmem:[%s4 + $0x28] sm:$0xff]
  %v1374 = vld [vmem:[%s4 + $0x30] sm:$0xff]
  %v1375 = vld [vmem:[%s4 + $0x38] sm:$0xff]
  %v1376 = vld [vmem:[%s5] sm:$0x1]
  %v1378 = vlaneseq
  %v1379 = vshrl.u32 %v1378, 7
  %v1380 = vsub.s32 0, %v1379
  %v1381 = vrot.slane %v1376, %v1380
  %v1384 = vsel %vm211, %v1360, 0
  %v1387 = vsel %vm211, %v1361, 0
  %v1390 = vsel %vm211, %v1362, 0
  %v1393 = vsel %vm211, %v1363, 0
  %v1396 = vsel %vm211, %v1364, 0
  %v1399 = vsel %vm211, %v1365, 0
  %v1402 = vsel %vm211, %v1366, 0
  %v1405 = vsel %vm211, %v1367, 0
  %1407 = vmatprep.subr.mxu0 0.0
  %1408 = vmatpush1.msra.mxu0 %v1368
  %1409 = vmatprep.subr.mxu0 0.0
  %1410 = vmatpush1.msra.mxu0 %v1369
  %1411 = vmatprep.subr.mxu0 0.0
  %1412 = vmatpush1.msra.mxu0 %v1370
  %1413 = vmatprep.subr.mxu0 0.0
  %1414 = vmatpush1.msra.mxu0 %v1371
  %1415 = vmatprep.subr.mxu0 0.0
  %1416 = vmatpush1.msra.mxu0 %v1372
  %1417 = vmatprep.subr.mxu0 0.0
  %1418 = vmatpush1.msra.mxu0 %v1373
  %1419 = vmatprep.subr.mxu0 0.0
  %1420 = vmatpush1.msra.mxu0 %v1374
  %1421 = vmatprep.subr.mxu0 0.0
  %1422 = vmatpush1.msra.mxu0 %v1375
  %1423 = vmatprep.subr.mxu0 0.0
  %1424 = vmatpush1.msra.mxu0 0.0
  %1425 = vmatprep.subr.mxu0 0.0
  %1426 = vmatpush1.msra.mxu0 0.0
  %1427 = vmatprep.subr.mxu0 0.0
  %1428 = vmatpush1.msra.mxu0 0.0
  %1429 = vmatprep.subr.mxu0 0.0
  %1430 = vmatpush1.msra.mxu0 0.0
  %1431 = vmatprep.subr.mxu0 0.0
  %1432 = vmatpush1.msra.mxu0 0.0
  %1433 = vmatprep.subr.mxu0 0.0
  %1434 = vmatpush1.msra.mxu0 0.0
  %1435 = vmatprep.subr.mxu0 0.0
  %1436 = vmatpush1.msra.mxu0 0.0
  %1437 = vmatprep.subr.mxu0 0.0
  %1438 = vmatpush1.msra.mxu0 0.0
  %1439 = vmatprep.subr.mxu0 0.0
  %1440 = vmatpush1.msra.mxu0 0.0
  %1441 = vmatprep.subr.mxu0 0.0
  %1442 = vmatpush1.msra.mxu0 0.0
  %1443 = vmatprep.subr.mxu0 0.0
  %1444 = vmatpush1.msra.mxu0 0.0
  %1445 = vmatprep.subr.mxu0 0.0
  %1446 = vmatpush1.msra.mxu0 0.0
  %1447 = vmatprep.subr.mxu0 0.0
  %1448 = vmatpush1.msra.mxu0 0.0
  %1449 = vmatprep.subr.mxu0 0.0
  %1450 = vmatpush1.msra.mxu0 0.0
  %1451 = vmatprep.subr.mxu0 0.0
  %1452 = vmatpush1.msra.mxu0 0.0
  %1453 = vmatprep.subr.mxu0 0.0
  %1454 = vmatpush1.msra.mxu0 0.0
  %1455 = vmatprep.subr.mxu0 0.0
  %1456 = vmatpush1.msra.mxu0 0.0
  %1457 = vmatprep.subr.mxu0 0.0
  %1458 = vmatpush1.msra.mxu0 0.0
  %1459 = vmatprep.subr.mxu0 0.0
  %1460 = vmatpush1.msra.mxu0 0.0
  %1461 = vmatprep.subr.mxu0 0.0
  %1462 = vmatpush1.msra.mxu0 0.0
  %1463 = vmatprep.subr.mxu0 0.0
  %1464 = vmatpush1.msra.mxu0 0.0
  %1465 = vmatprep.subr.mxu0 0.0
  %1466 = vmatpush1.msra.mxu0 0.0
  %1467 = vmatprep.subr.mxu0 0.0
  %1468 = vmatpush1.msra.mxu0 0.0
  %1469 = vmatprep.subr.mxu0 0.0
  %1470 = vmatpush1.msra.mxu0 0.0
  %1471 = vmatprep.mubr.f32.mxu0 0.0
  %1472 = vmatmul.mubr.f32.gmra.mrb[0].mxu0 %v1384
  %v1473 = vpop.f32.mrb[0].mxu0
  %v1474 = vadd.f32 %v1381, %v1473
  %v1475 = vpop.f32.mrb[0].mxu0
  %1476 = vmatprep.mubr.f32.mxu0 0.0
  %1477 = vmatmul.mubr.f32.gmra.mrb[0].mxu0 %v1387
  %v1478 = vpop.f32.mrb[0].mxu0
  %v1479 = vadd.f32 %v1381, %v1478
  %v1480 = vpop.f32.mrb[0].mxu0
  %1481 = vmatprep.mubr.f32.mxu0 0.0
  %1482 = vmatmul.mubr.f32.gmra.mrb[0].mxu0 %v1390
  %v1483 = vpop.f32.mrb[0].mxu0
  %v1484 = vadd.f32 %v1381, %v1483
  %v1485 = vpop.f32.mrb[0].mxu0
  %1486 = vmatprep.mubr.f32.mxu0 0.0
  %1487 = vmatmul.mubr.f32.gmra.mrb[0].mxu0 %v1393
  %v1488 = vpop.f32.mrb[0].mxu0
  %v1489 = vadd.f32 %v1381, %v1488
  %v1490 = vpop.f32.mrb[0].mxu0
  %1491 = vmatprep.mubr.f32.mxu0 0.0
  %1492 = vmatmul.mubr.f32.gmra.mrb[0].mxu0 %v1396
  %v1493 = vpop.f32.mrb[0].mxu0
  %v1494 = vadd.f32 %v1381, %v1493
  %v1495 = vpop.f32.mrb[0].mxu0
  %1496 = vmatprep.mubr.f32.mxu0 0.0
  %1497 = vmatmul.mubr.f32.gmra.mrb[0].mxu0 %v1399
  %v1498 = vpop.f32.mrb[0].mxu0
  %v1499 = vadd.f32 %v1381, %v1498
  %v1500 = vpop.f32.mrb[0].mxu0
  %1501 = vmatprep.mubr.f32.mxu0 0.0
  %1502 = vmatmul.mubr.f32.gmra.mrb[0].mxu0 %v1402
  %v1503 = vpop.f32.mrb[0].mxu0
  %v1504 = vadd.f32 %v1381, %v1503
  %v1505 = vpop.f32.mrb[0].mxu0
  %1506 = vmatprep.mubr.f32.mxu0 0.0
  %1507 = vmatmul.mubr.f32.gmra.mrb[0].mxu0 %v1405
  %v1508 = vpop.f32.mrb[0].mxu0
  %v1509 = vadd.f32 %v1381, %v1508
  %v1510 = vpop.f32.mrb[0].mxu0
  %1511 = vdwg.mxu0
  %v1512 = vtanh.pop %v1474
  %v1513 = vtanh.pop %v1479
  %v1514 = vtanh.pop %v1484
  %v1515 = vtanh.pop %v1489
  %v1516 = vtanh.pop %v1494
  %v1517 = vtanh.pop %v1499
  %v1518 = vtanh.pop %v1504
  %v1519 = vtanh.pop %v1509
  %v1520 = vld [vmem:[%s6] sm:$0xff]
  %v1521 = vld [vmem:[%s6 + $0x8] sm:$0xff]
  %v1522 = vld [vmem:[%s6 + $0x10] sm:$0xff]
  %v1523 = vld [vmem:[%s6 + $0x18] sm:$0xff]
  %v1524 = vld [vmem:[%s7] sm:$0x1]
  %v1526 = vlaneseq
  %v1527 = vshrl.u32 %v1526, 7
  %v1528 = vsub.s32 0, %v1527
  %v1529 = vrot.slane %v1524, %v1528
  %v1532 = vsel %vm57, %v1512, 0
  %v1535 = vsel %vm57, %v1513, 0
  %v1538 = vsel %vm57, %v1514, 0
  %v1541 = vsel %vm57, %v1515, 0
  %v1544 = vsel %vm57, %v1516, 0
  %v1547 = vsel %vm57, %v1517, 0
  %v1550 = vsel %vm57, %v1518, 0
  %v1553 = vsel %vm57, %v1519, 0
  %1555 = vmatprep.subr.mxu0 0.0
  %1556 = vmatpush1.msra.mxu0 %v1520
  %1557 = vmatprep.subr.mxu0 0.0
  %1558 = vmatpush1.msra.mxu0 %v1521
  %1559 = vmatprep.subr.mxu0 0.0
  %1560 = vmatpush1.msra.mxu0 %v1522
  %1561 = vmatprep.subr.mxu0 0.0
  %1562 = vmatpush1.msra.mxu0 %v1523
  %1563 = vmatprep.subr.mxu0 0.0
  %1564 = vmatpush1.msra.mxu0 0.0
  %1565 = vmatprep.subr.mxu0 0.0
  %1566 = vmatpush1.msra.mxu0 0.0
  %1567 = vmatprep.subr.mxu0 0.0
  %1568 = vmatpush1.msra.mxu0 0.0
  %1569 = vmatprep.subr.mxu0 0.0
  %1570 = vmatpush1.msra.mxu0 0.0
  %1571 = vmatprep.subr.mxu0 0.0
  %1572 = vmatpush1.msra.mxu0 0.0
  %1573 = vmatprep.subr.mxu0 0.0
  %1574 = vmatpush1.msra.mxu0 0.0
  %1575 = vmatprep.subr.mxu0 0.0
  %1576 = vmatpush1.msra.mxu0 0.0
  %1577 = vmatprep.subr.mxu0 0.0
  %1578 = vmatpush1.msra.mxu0 0.0
  %1579 = vmatprep.subr.mxu0 0.0
  %1580 = vmatpush1.msra.mxu0 0.0
  %1581 = vmatprep.subr.mxu0 0.0
  %1582 = vmatpush1.msra.mxu0 0.0
  %1583 = vmatprep.subr.mxu0 0.0
  %1584 = vmatpush1.msra.mxu0 0.0
  %1585 = vmatprep.subr.mxu0 0.0
  %1586 = vmatpush1.msra.mxu0 0.0
  %1587 = vmatprep.subr.mxu0 0.0
  %1588 = vmatpush1.msra.mxu0 0.0
  %1589 = vmatprep.subr.mxu0 0.0
  %1590 = vmatpush1.msra.mxu0 0.0
  %1591 = vmatprep.subr.mxu0 0.0
  %1592 = vmatpush1.msra.mxu0 0.0
  %1593 = vmatprep.subr.mxu0 0.0
  %1594 = vmatpush1.msra.mxu0 0.0
  %1595 = vmatprep.subr.mxu0 0.0
  %1596 = vmatpush1.msra.mxu0 0.0
  %1597 = vmatprep.subr.mxu0 0.0
  %1598 = vmatpush1.msra.mxu0 0.0
  %1599 = vmatprep.subr.mxu0 0.0
  %1600 = vmatpush1.msra.mxu0 0.0
  %1601 = vmatprep.subr.mxu0 0.0
  %1602 = vmatpush1.msra.mxu0 0.0
  %1603 = vmatprep.subr.mxu0 0.0
  %1604 = vmatpush1.msra.mxu0 0.0
  %1605 = vmatprep.subr.mxu0 0.0
  %1606 = vmatpush1.msra.mxu0 0.0
  %1607 = vmatprep.subr.mxu0 0.0
  %1608 = vmatpush1.msra.mxu0 0.0
  %1609 = vmatprep.subr.mxu0 0.0
  %1610 = vmatpush1.msra.mxu0 0.0
  %1611 = vmatprep.subr.mxu0 0.0
  %1612 = vmatpush1.msra.mxu0 0.0
  %1613 = vmatprep.subr.mxu0 0.0
  %1614 = vmatpush1.msra.mxu0 0.0
  %1615 = vmatprep.subr.mxu0 0.0
  %1616 = vmatpush1.msra.mxu0 0.0
  %1617 = vmatprep.subr.mxu0 0.0
  %1618 = vmatpush1.msra.mxu0 0.0
  %1619 = vmatprep.mubr.f32.mxu0 0.0
  %1620 = vmatmul.mubr.f32.gmra.mrb[0].mxu0 %v1532
  %v1621 = vpop.f32.mrb[0].mxu0
  %v1622 = vadd.f32 %v1529, %v1621
  %v1623 = vpop.f32.mrb[0].mxu0
  %1624 = vmatprep.mubr.f32.mxu0 0.0
  %1625 = vmatmul.mubr.f32.gmra.mrb[0].mxu0 %v1535
  %v1626 = vpop.f32.mrb[0].mxu0
  %v1627 = vadd.f32 %v1529, %v1626
  %v1628 = vpop.f32.mrb[0].mxu0
  %1629 = vmatprep.mubr.f32.mxu0 0.0
  %1630 = vmatmul.mubr.f32.gmra.mrb[0].mxu0 %v1538
  %v1631 = vpop.f32.mrb[0].mxu0
  %v1632 = vadd.f32 %v1529, %v1631
  %v1633 = vpop.f32.mrb[0].mxu0
  %1634 = vmatprep.mubr.f32.mxu0 0.0
  %1635 = vmatmul.mubr.f32.gmra.mrb[0].mxu0 %v1541
  %v1636 = vpop.f32.mrb[0].mxu0
  %v1637 = vadd.f32 %v1529, %v1636
  %v1638 = vpop.f32.mrb[0].mxu0
  %1639 = vmatprep.mubr.f32.mxu0 0.0
  %1640 = vmatmul.mubr.f32.gmra.mrb[0].mxu0 %v1544
  %v1641 = vpop.f32.mrb[0].mxu0
  %v1642 = vadd.f32 %v1529, %v1641
  %v1643 = vpop.f32.mrb[0].mxu0
  %1644 = vmatprep.mubr.f32.mxu0 0.0
  %1645 = vmatmul.mubr.f32.gmra.mrb[0].mxu0 %v1547
  %v1646 = vpop.f32.mrb[0].mxu0
  %v1647 = vadd.f32 %v1529, %v1646
  %v1648 = vpop.f32.mrb[0].mxu0
  %1649 = vmatprep.mubr.f32.mxu0 0.0
  %1650 = vmatmul.mubr.f32.gmra.mrb[0].mxu0 %v1550
  %v1651 = vpop.f32.mrb[0].mxu0
  %v1652 = vadd.f32 %v1529, %v1651
  %v1653 = vpop.f32.mrb[0].mxu0
  %1654 = vmatprep.mubr.f32.mxu0 0.0
  %1655 = vmatmul.mubr.f32.gmra.mrb[0].mxu0 %v1553
  %v1656 = vpop.f32.mrb[0].mxu0
  %v1657 = vadd.f32 %v1529, %v1656
  %v1658 = vpop.f32.mrb[0].mxu0
  %1659 = vdwg.mxu0
  %v1660 = vmax.f32 %v1622, %v1627
  %v1661 = vmax.f32 %v1660, %v1632
  %v1662 = vmax.f32 %v1661, %v1637
  %v1663 = vmax.f32 %v1662, %v1642
  %v1664 = vmax.f32 %v1663, %v1647
  %v1665 = vmax.f32 %v1664, %v1652
  %v1666 = vmax.f32 %v1665, %v1657
  %v1667 = vsub.f32 %v1622, %v1666
  %v1668 = vmul.f32 %v1667, 1.442695
  %v1669 = vpow.pop %v1668
  %v1670 = vadd.f32 %v1669, 0.0
  %v1671 = vsub.f32 %v1627, %v1666
  %v1672 = vmul.f32 %v1671, 1.442695
  %v1673 = vpow.pop %v1672
  %v1674 = vadd.f32 %v1670, %v1673
  %v1675 = vsub.f32 %v1632, %v1666
  %v1676 = vmul.f32 %v1675, 1.442695
  %v1677 = vpow.pop %v1676
  %v1678 = vadd.f32 %v1674, %v1677
  %v1679 = vsub.f32 %v1637, %v1666
  %v1680 = vmul.f32 %v1679, 1.442695
  %v1681 = vpow.pop %v1680
  %v1682 = vadd.f32 %v1678, %v1681
  %v1683 = vsub.f32 %v1642, %v1666
  %v1684 = vmul.f32 %v1683, 1.442695
  %v1685 = vpow.pop %v1684
  %v1686 = vadd.f32 %v1682, %v1685
  %v1687 = vsub.f32 %v1647, %v1666
  %v1688 = vmul.f32 %v1687, 1.442695
  %v1689 = vpow.pop %v1688
  %v1690 = vadd.f32 %v1686, %v1689
  %v1691 = vsub.f32 %v1652, %v1666
  %v1692 = vmul.f32 %v1691, 1.442695
  %v1693 = vpow.pop %v1692
  %v1694 = vadd.f32 %v1690, %v1693
  %v1695 = vsub.f32 %v1657, %v1666
  %v1696 = vmul.f32 %v1695, 1.442695
  %v1697 = vpow.pop %v1696
  %v1698 = vadd.f32 %v1694, %v1697
  %v1699 = vrcp.pop %v1698
  %v1700 = vmul.f32 1.0, %v1699
  %v1701 = vmul.f32 %v1669, %v1700
  %v1702 = vsel %vm57, %v1701, 0.0
  %1703 = vadd.xlane.f32.xlu0 %v1702
  %v1704 = vpop.xlane.xlu0 %1703
  %v1705 = vrcp.pop 32.0
  %v1706 = vmul.f32 %v1704, %v1705
  %v1707 = vmul.f32 %v1706, %v1360
  %v1708 = vadd.f32 %v1707, 0.0
  %v1709 = vmul.f32 %v1673, %v1700
  %v1710 = vsel %vm57, %v1709, 0.0
  %1711 = vadd.xlane.f32.xlu0 %v1710
  %v1712 = vpop.xlane.xlu0 %1711
  %v1713 = vmul.f32 %v1712, %v1705
  %v1714 = vmul.f32 %v1713, %v1361
  %v1715 = vadd.f32 %v1708, %v1714
  %v1716 = vmul.f32 %v1677, %v1700
  %v1717 = vsel %vm57, %v1716, 0.0
  %1718 = vadd.xlane.f32.xlu0 %v1717
  %v1719 = vpop.xlane.xlu0 %1718
  %v1720 = vmul.f32 %v1719, %v1705
  %v1721 = vmul.f32 %v1720, %v1362
  %v1722 = vadd.f32 %v1715, %v1721
  %v1723 = vmul.f32 %v1681, %v1700
  %v1724 = vsel %vm57, %v1723, 0.0
  %1725 = vadd.xlane.f32.xlu0 %v1724
  %v1726 = vpop.xlane.xlu0 %1725
  %v1727 = vmul.f32 %v1726, %v1705
  %v1728 = vmul.f32 %v1727, %v1363
  %v1729 = vadd.f32 %v1722, %v1728
  %v1730 = vmul.f32 %v1685, %v1700
  %v1731 = vsel %vm57, %v1730, 0.0
  %1732 = vadd.xlane.f32.xlu0 %v1731
  %v1733 = vpop.xlane.xlu0 %1732
  %v1734 = vmul.f32 %v1733, %v1705
  %v1735 = vmul.f32 %v1734, %v1364
  %v1736 = vadd.f32 %v1729, %v1735
  %v1737 = vmul.f32 %v1689, %v1700
  %v1738 = vsel %vm57, %v1737, 0.0
  %1739 = vadd.xlane.f32.xlu0 %v1738
  %v1740 = vpop.xlane.xlu0 %1739
  %v1741 = vmul.f32 %v1740, %v1705
  %v1742 = vmul.f32 %v1741, %v1365
  %v1743 = vadd.f32 %v1736, %v1742
  %v1744 = vmul.f32 %v1693, %v1700
  %v1745 = vsel %vm57, %v1744, 0.0
  %1746 = vadd.xlane.f32.xlu0 %v1745
  %v1747 = vpop.xlane.xlu0 %1746
  %v1748 = vmul.f32 %v1747, %v1705
  %v1749 = vmul.f32 %v1748, %v1366
  %v1750 = vadd.f32 %v1743, %v1749
  %v1751 = vmul.f32 %v1697, %v1700
  %v1752 = vsel %vm57, %v1751, 0.0
  %1753 = vadd.xlane.f32.xlu0 %v1752
  %v1754 = vpop.xlane.xlu0 %1753
  %v1755 = vmul.f32 %v1754, %v1705
  %v1756 = vmul.f32 %v1755, %v1367
  %v1757 = vadd.f32 %v1750, %v1756
  %1758 = vst.msk [vmem:[%s8] sm:$0xff] %vm211, %v1757
  // Predicated region
  $region34: #{encoder_forward.1} parent=0 // pred_check
    _
  $region35: #{encoder_forward.1} parent=0 // pred_check_branch
    %1760 = sbr.rel (0) target = $region37
  $region36: #{encoder_forward.1} parent=0 // pred_region
    _
  $region37: #{encoder_forward.1} parent=0 // pred_fallthru
    _
  // Predicated region
  $region38: #{encoder_forward.1} parent=0 // pred_check
    _
  $region39: #{encoder_forward.1} parent=0 // pred_check_branch
    %1762 = sbr.rel (0) target = $region41
  $region40: #{encoder_forward.1} parent=0 // pred_region
    _
  $region41: #{encoder_forward.1} parent=0 // pred_fallthru
    _

</llo_original>
